<compile_context>
chip_gen: v7x
topology: tpu7x:2x2x1
jax: 0.10.0
libtpu: 0.0.40
codegen_flags: <defaults>
</compile_context>

<pallas_src>
import functools

import jax
import jax.numpy as jnp
from jax.experimental import pallas as pl
from jax.experimental.pallas import tpu as pltpu


def _round_up(x, m):
    return (x + m - 1) // m * m


def _tnm_kernel(e1_ref, e2_ref, wr_ref, tile_ref, sel_ref, bias_ref, out_ref):
    """relu( (e1 W e2) + [e1,e2] @ Wb^T + bias ) for one batch tile, MXU-only."""
    e1 = e1_ref[...]                                    # (Bt, F3)
    e2 = e2_ref[...]                                    # (Bt, F3)

    # R[b, t*F3+i]   = sum_j e2[b, j] * W[i, j, t]
    r = jnp.dot(e2, wr_ref[...], preferred_element_type=jnp.float32)    # (Bt, T*F3)
    # E1t[b, t*F3+i] = e1[b, i]   (lane replication done on the MXU, no shuffles)
    e1t = jnp.dot(e1, tile_ref[...], preferred_element_type=jnp.float32)  # (Bt, T*F3)

    # Z = [ (e1 ⊗ e2 contracted per-t lanes) | e1 | e2 ]
    z = jnp.concatenate([r * e1t, e1, e2], axis=1)      # (Bt, T*F3 + 2*F3)

    # One matmul does both the per-t segment reduction (block-diagonal selector)
    # and the [e1,e2] @ Wb^T block-scoring term.
    pre = jnp.dot(z, sel_ref[...], preferred_element_type=jnp.float32)  # (Bt, T)

    out_ref[...] = jnp.maximum(pre + bias_ref[...], 0.0)


def pack_tensor_network_params(weight_matrix, weight_matrix_block, bias):
    """One-time parameter packing (hoisted out of the forward path).

    weight_matrix       : (F3, F3, T)
    weight_matrix_block : (T, 2*F3)
    bias                : (T, 1)
    """
    F3 = weight_matrix.shape[0]
    T = weight_matrix.shape[2]
    dt = weight_matrix.dtype

    # W_r[j, t*F3 + i] = W[i, j, t]
    w_r = jnp.transpose(weight_matrix, (1, 2, 0)).reshape(F3, T * F3)
    # Tile[k, t*F3 + i] = (k == i): replicates e1 across the T lane segments.
    tile = jnp.tile(jnp.eye(F3, dtype=dt), (1, T))                       # (F3, T*F3)
    # Block-diagonal selector: S[t*F3 + i, t'] = (t == t')
    sel = jnp.repeat(jnp.eye(T, dtype=dt), F3, axis=0)                   # (T*F3, T)
    wb1 = weight_matrix_block[:, :F3].T                                  # (F3, T)
    wb2 = weight_matrix_block[:, F3:].T                                  # (F3, T)
    sel_aug = jnp.concatenate([sel, wb1, wb2], axis=0)                   # (T*F3+2*F3, T)
    bias_row = bias.reshape(1, T)
    return w_r, tile, sel_aug, bias_row


def tensor_network_forward(embedding_1, embedding_2, packed_params, *, block_b=256):
    """Pallas equivalent of TensorNetworkModule.forward.

    embedding_1, embedding_2 : (B, F3) float32
    packed_params            : output of pack_tensor_network_params
    returns                  : (B, T) float32
    """
    w_r, tile, sel_aug, bias_row = packed_params
    B, F3 = embedding_1.shape
    T = bias_row.shape[1]
    K = sel_aug.shape[0]

    # Batch tiling: process up to `block_b` graph pairs per grid step.
    bt = min(block_b, _round_up(max(B, 1), 8))
    bp = _round_up(B, bt)
    e1 = embedding_1
    e2 = embedding_2
    if bp != B:
        e1 = jnp.pad(e1, ((0, bp - B), (0, 0)))
        e2 = jnp.pad(e2, ((0, bp - B), (0, 0)))

    out = pl.pallas_call(
        _tnm_kernel,
        out_shape=jax.ShapeDtypeStruct((bp, T), jnp.float32),
        grid=(bp // bt,),
        in_specs=[
            pl.BlockSpec((bt, F3), lambda i: (i, 0)),        # e1 batch tile
            pl.BlockSpec((bt, F3), lambda i: (i, 0)),        # e2 batch tile
            pl.BlockSpec((F3, T * F3), lambda i: (0, 0)),    # W_r   (resident)
            pl.BlockSpec((F3, T * F3), lambda i: (0, 0)),    # Tile  (resident)
            pl.BlockSpec((K, T), lambda i: (0, 0)),          # S_aug (resident)
            pl.BlockSpec((1, T), lambda i: (0, 0)),          # bias  (resident)
        ],
        out_specs=pl.BlockSpec((bt, T), lambda i: (i, 0)),
        compiler_params=pltpu.CompilerParams(
            dimension_semantics=("parallel",)),
    )(e1, e2, w_r, tile, sel_aug, bias_row)

    return out[:B]


def _reference_forward(e1, e2, W, Wb, bias):
    """Pure-JAX reference mirroring the PyTorch module exactly."""
    B, F3 = e1.shape
    T = W.shape[2]
    scoring = jnp.matmul(e1, W.reshape(F3, -1))                 # (B, F3*T)
    scoring = scoring.reshape(B, F3, T).transpose(0, 2, 1)      # (B, T, F3)
    scoring = jnp.matmul(scoring, e2.reshape(B, F3, 1)).reshape(B, -1)
    combined = jnp.concatenate([e1, e2], axis=1)                # (B, 2F3)
    block = (Wb @ combined.T).T                                 # (B, T)
    return jax.nn.relu(scoring + block + bias.reshape(-1))


if __name__ == "__main__":
    # args = {'filters_3': 32, 'tensor_neurons': 16}; batch of graph pairs = 512
    B, F3, T = 512, 32, 16

    key = jax.random.PRNGKey(0)
    k_w, k_wb, k_b, k_e1, k_e2 = jax.random.split(key, 5)

    # Deterministic xavier_uniform-style initialization (PyTorch fan conventions).
    bound_w = (6.0 / (F3 * T + F3 * T)) ** 0.5
    weight_matrix = jax.random.uniform(k_w, (F3, F3, T), jnp.float32,
                                       -bound_w, bound_w)
    bound_wb = (6.0 / (2 * F3 + T)) ** 0.5
    weight_matrix_block = jax.random.uniform(k_wb, (T, 2 * F3), jnp.float32,
                                             -bound_wb, bound_wb)
    bound_b = (6.0 / (1 + T)) ** 0.5
    bias = jax.random.uniform(k_b, (T, 1), jnp.float32, -bound_b, bound_b)

    embedding_1 = jax.random.normal(k_e1, (B, F3), jnp.float32)
    embedding_2 = jax.random.normal(k_e2, (B, F3), jnp.float32)

    # Parameter packing done once (not on the per-call forward path).
    packed = pack_tensor_network_params(weight_matrix, weight_matrix_block, bias)
    packed = jax.tree_util.tree_map(jax.block_until_ready, packed)

    out = tensor_network_forward(embedding_1, embedding_2, packed)
    out = jax.block_until_ready(out)

    ref = _reference_forward(embedding_1, embedding_2, weight_matrix,
                             weight_matrix_block, bias)
    assert out.shape == (B, T)
    assert jnp.allclose(out, ref, atol=1e-4, rtol=1e-4), "mismatch vs reference"

    print("KERNEL_OK")
</pallas_src>

<mosaic_0001>
module attributes {stable_mosaic.version = 11 : i64} {
  func.func @_tnm_kernel(%arg0: i32, %arg1: memref<256x32xf32, #tpu.memory_space<vmem>>, %arg2: memref<256x32xf32, #tpu.memory_space<vmem>>, %arg3: memref<32x512xf32, #tpu.memory_space<vmem>>, %arg4: memref<32x512xf32, #tpu.memory_space<vmem>>, %arg5: memref<576x16xf32, #tpu.memory_space<vmem>>, %arg6: memref<1x16xf32, #tpu.memory_space<vmem>>, %arg7: memref<256x16xf32, #tpu.memory_space<vmem>>) attributes {dimension_semantics = [#tpu.dimension_semantics<parallel>], iteration_bounds = array<i64: 2>, scalar_prefetch = 0 : i64, scratch_operands = 0 : i64, tpu.core_type = #tpu.core_type<tc>, window_params = [{transform_indices = @transform_0, window_bounds = array<i64: 256, 32>}, {transform_indices = @transform_1, window_bounds = array<i64: 256, 32>}, {pipeline_mode = #tpu.pipeline_mode<synchronous>, transform_indices = @transform_2, window_bounds = array<i64: 32, 512>}, {pipeline_mode = #tpu.pipeline_mode<synchronous>, transform_indices = @transform_3, window_bounds = array<i64: 32, 512>}, {pipeline_mode = #tpu.pipeline_mode<synchronous>, transform_indices = @transform_4, window_bounds = array<i64: 576, 16>}, {pipeline_mode = #tpu.pipeline_mode<synchronous>, transform_indices = @transform_5, window_bounds = array<i64: 1, 16>}, {transform_indices = @transform_6, window_bounds = array<i64: 256, 16>}]} {
    %c0 = arith.constant 0 : index
    %c0_0 = arith.constant 0 : index
    %0 = vector.load %arg1[%c0, %c0_0] : memref<256x32xf32, #tpu.memory_space<vmem>>, vector<256x32xf32>
    %c0_1 = arith.constant 0 : index
    %c0_2 = arith.constant 0 : index
    %1 = vector.load %arg2[%c0_1, %c0_2] : memref<256x32xf32, #tpu.memory_space<vmem>>, vector<256x32xf32>
    %c0_3 = arith.constant 0 : index
    %c0_4 = arith.constant 0 : index
    %2 = vector.load %arg3[%c0_3, %c0_4] : memref<32x512xf32, #tpu.memory_space<vmem>>, vector<32x512xf32>
    %cst = arith.constant dense<0.000000e+00> : vector<256x512xf32>
    %3 = tpu.matmul %1, %2, %cst {dimension_numbers = #tpu.dot_dimension_numbers<[1], [0], [0], [1], [0, 0, 1, 1], [], []>} : vector<256x32xf32>, vector<32x512xf32>, vector<256x512xf32> -> vector<256x512xf32>
    %c0_5 = arith.constant 0 : index
    %c0_6 = arith.constant 0 : index
    %4 = vector.load %arg4[%c0_5, %c0_6] : memref<32x512xf32, #tpu.memory_space<vmem>>, vector<32x512xf32>
    %cst_7 = arith.constant dense<0.000000e+00> : vector<256x512xf32>
    %5 = tpu.matmul %0, %4, %cst_7 {dimension_numbers = #tpu.dot_dimension_numbers<[1], [0], [0], [1], [0, 0, 1, 1], [], []>} : vector<256x32xf32>, vector<32x512xf32>, vector<256x512xf32> -> vector<256x512xf32>
    %6 = arith.mulf %3, %5 : vector<256x512xf32>
    %7 = tpu.concatenate %6, %0, %1 in 1 : vector<256x512xf32>, vector<256x32xf32>, vector<256x32xf32> -> vector<256x576xf32>
    %c0_8 = arith.constant 0 : index
    %c0_9 = arith.constant 0 : index
    %8 = vector.load %arg5[%c0_8, %c0_9] : memref<576x16xf32, #tpu.memory_space<vmem>>, vector<576x16xf32>
    %cst_10 = arith.constant dense<0.000000e+00> : vector<256x16xf32>
    %9 = tpu.matmul %7, %8, %cst_10 {dimension_numbers = #tpu.dot_dimension_numbers<[1], [0], [0], [1], [0, 0, 1, 1], [], []>} : vector<256x576xf32>, vector<576x16xf32>, vector<256x16xf32> -> vector<256x16xf32>
    %c0_11 = arith.constant 0 : index
    %c0_12 = arith.constant 0 : index
    %10 = vector.load %arg6[%c0_11, %c0_12] : memref<1x16xf32, #tpu.memory_space<vmem>>, vector<1x16xf32>
    %11 = vector.broadcast %10 : vector<1x16xf32> to vector<256x16xf32>
    %12 = arith.addf %9, %11 : vector<256x16xf32>
    %cst_13 = arith.constant 0.000000e+00 : f32
    %13 = vector.broadcast %cst_13 : f32 to vector<256x16xf32>
    %14 = arith.maximumf %12, %13 : vector<256x16xf32>
    %c0_14 = arith.constant 0 : index
    %c0_15 = arith.constant 0 : index
    %15 = vector.load %arg7[%c0_14, %c0_15] : memref<256x16xf32, #tpu.memory_space<vmem>>, vector<256x16xf32>
    tpu.vector_store %arg7[%c0_14, %c0_15], %14 {strides = array<i32>} : memref<256x16xf32, #tpu.memory_space<vmem>>, vector<256x16xf32>,
    return
  }
  func.func @transform_0(%arg0: i32) -> (i32, i32) {
    %c0_i32 = arith.constant 0 : i32
    %c0_i32_0 = arith.constant 0 : i32
    return %arg0, %c0_i32 : i32, i32
  }
  func.func @transform_1(%arg0: i32) -> (i32, i32) {
    %c0_i32 = arith.constant 0 : i32
    %c0_i32_0 = arith.constant 0 : i32
    return %arg0, %c0_i32 : i32, i32
  }
  func.func @transform_2(%arg0: i32) -> (i32, i32) {
    %c0_i32 = arith.constant 0 : i32
    %c0_i32_0 = arith.constant 0 : i32
    %c0_i32_1 = arith.constant 0 : i32
    return %c0_i32, %c0_i32_0 : i32, i32
  }
  func.func @transform_3(%arg0: i32) -> (i32, i32) {
    %c0_i32 = arith.constant 0 : i32
    %c0_i32_0 = arith.constant 0 : i32
    %c0_i32_1 = arith.constant 0 : i32
    return %c0_i32, %c0_i32_0 : i32, i32
  }
  func.func @transform_4(%arg0: i32) -> (i32, i32) {
    %c0_i32 = arith.constant 0 : i32
    %c0_i32_0 = arith.constant 0 : i32
    %c0_i32_1 = arith.constant 0 : i32
    return %c0_i32, %c0_i32_0 : i32, i32
  }
  func.func @transform_5(%arg0: i32) -> (i32, i32) {
    %c0_i32 = arith.constant 0 : i32
    %c0_i32_0 = arith.constant 0 : i32
    %c0_i32_1 = arith.constant 0 : i32
    return %c0_i32, %c0_i32_0 : i32, i32
  }
  func.func @transform_6(%arg0: i32) -> (i32, i32) {
    %c0_i32 = arith.constant 0 : i32
    %c0_i32_0 = arith.constant 0 : i32
    return %arg0, %c0_i32 : i32, i32
  }
}

</mosaic_0001>

<llo_original>
// kernel: tpu_custom_call.1
$region0: #{tpu_custom_call.1}
  #allocation0 [shape = 'u32[]', space=smem, size = 0x4, offset = 0x4, fixed_abs, tag = 'smem constant byte address 0x4 - core index']
  #allocation1 [shape = 'u32[144,128]{1,0:T(1,128)}', space=vmem, size = 0x12000, scoped, tag = 'internal scratch']
  %s0 = inlined_call_operand.vmem [shape: f32[512,32], index: 0, kind: input, shape index: {}]
  %s1 = inlined_call_operand.vmem [shape: f32[512,32], index: 1, kind: input, shape index: {}]
  %s2 = inlined_call_operand.vmem [shape: f32[32,512], index: 2, kind: input, shape index: {}]
  %s3 = inlined_call_operand.vmem [shape: f32[32,512], index: 3, kind: input, shape index: {}]
  %s4 = inlined_call_operand.vmem [shape: f32[576,16], index: 4, kind: input, shape index: {}]
  %s5 = inlined_call_operand.vmem [shape: f32[1,16], index: 5, kind: input, shape index: {}]
  %s6 = inlined_call_operand.vmem [shape: f32[512,16], index: 6, kind: output, shape index: {}]
  %s7 = sld [smem:[#allocation0]]
  $region57: #{tpu_custom_call.1} parent=0
    _
  %s9 = ssub.s32 1, %s7
  %s10 = scalar_select 0, %s9, %s7
  loop: start=0, step=1, limit=4
  $region2: #{tpu_custom_call.1} parent=0 // loop_pre_header
    _
  $region3: #{tpu_custom_call.1} parent=0 // loop_header
    %s12 = sphi 0, %s16
    %p13 = scmp.ge.s32.totalorder %s12, 4
    %s22 = sphi 0, %s24
    %s25 = sphi 0, %s22
    %s26 = sphi 0, %s25
    %s42 = sphi 0, %s26
    %s48 = sphi 0, %s50
    %s51 = sphi 0, %s48
    %s52 = sphi 0, %s51
    %s68 = sphi 0, %s52
    %s72 = sphi 0, %s72
    %s74 = sphi 0, %s72
    %s75 = sphi 0, %s74
    %s89 = sphi 0, %s75
    %s93 = sphi 0, %s93
    %s95 = sphi 0, %s93
    %s96 = sphi 0, %s95
    %s110 = sphi 0, %s96
    %s114 = sphi 0, %s114
    %s116 = sphi 0, %s114
    %s117 = sphi 0, %s116
    %s131 = sphi 0, %s117
    %s135 = sphi 0, %s135
    %s137 = sphi 0, %s135
    %s138 = sphi 0, %s137
    %s152 = sphi 0, %s138
    %s158 = sphi 0, %s160
    %s161 = sphi 0, %s158
    %s162 = sphi 0, %s161
    %s178 = sphi 0, %s162
  $region4: #{tpu_custom_call.1} parent=0 // loop_header_branch
    %15 = sbr.rel (%p13) target = $region8
  $region5: #{tpu_custom_call.1} parent=0 // loop_body
    %s17 = ssub.s32 %s12, 1
    %s18 = ssub.s32 %s12, 2
    %s19 = sadd.s32 %s12, 1
    %s20 = ssub.s32 %s12, %s19
    %p21 = scmp.eq.s32.totalorder %s20, 0
    %s23 = sadd.s32 %s22, 1
    %s24 = scalar_select %p21, %s22, %s23
    %p27 = pneg %p21
    %p28 = scmp.eq.s32.totalorder %s12, 1
    %p29 = por %p27, %p28
    %p30 = scmp.ne.s32.totalorder %s22, %s25
    %p31 = scmp.eq.s32.totalorder %s12, 0
    %p32 = por %p30, %p31
    %p33 = scmp.ne.s32.totalorder %s22, %s25
    %p34 = scmp.eq.s32.totalorder %s17, 1
    %p35 = por %p33, %p34
    %p36 = scmp.ne.s32.totalorder %s25, %s26
    %p37 = scmp.eq.s32.totalorder %s17, 0
    %p38 = por %p36, %p37
    %p39 = scmp.ne.s32.totalorder %s25, %s26
    %p40 = scmp.eq.s32.totalorder %s18, 1
    %p41 = por %p39, %p40
    %p43 = scmp.ne.s32.totalorder %s26, %s42
    %p44 = scmp.eq.s32.totalorder %s18, 0
    %p45 = por %p43, %p44
    %s46 = ssub.s32 %s12, %s19
    %p47 = scmp.eq.s32.totalorder %s46, 0
    %s49 = sadd.s32 %s48, 1
    %s50 = scalar_select %p47, %s48, %s49
    %p53 = pneg %p47
    %p54 = scmp.eq.s32.totalorder %s12, 1
    %p55 = por %p53, %p54
    %p56 = scmp.ne.s32.totalorder %s48, %s51
    %p57 = scmp.eq.s32.totalorder %s12, 0
    %p58 = por %p56, %p57
    %p59 = scmp.ne.s32.totalorder %s48, %s51
    %p60 = scmp.eq.s32.totalorder %s17, 1
    %p61 = por %p59, %p60
    %p62 = scmp.ne.s32.totalorder %s51, %s52
    %p63 = scmp.eq.s32.totalorder %s17, 0
    %p64 = por %p62, %p63
    %p65 = scmp.ne.s32.totalorder %s51, %s52
    %p66 = scmp.eq.s32.totalorder %s18, 1
    %p67 = por %p65, %p66
    %p69 = scmp.ne.s32.totalorder %s52, %s68
    %p70 = scmp.eq.s32.totalorder %s18, 0
    %p71 = por %p69, %p70
    %s73 = sadd.s32 %s72, 1
    %p76 = scmp.eq.s32.totalorder %s12, 1
    %p77 = scmp.ne.s32.totalorder %s72, %s74
    %p78 = scmp.eq.s32.totalorder %s12, 0
    %p79 = por %p77, %p78
    %p80 = scmp.ne.s32.totalorder %s72, %s74
    %p81 = scmp.eq.s32.totalorder %s17, 1
    %p82 = por %p80, %p81
    %p83 = scmp.ne.s32.totalorder %s74, %s75
    %p84 = scmp.eq.s32.totalorder %s17, 0
    %p85 = por %p83, %p84
    %p86 = scmp.ne.s32.totalorder %s74, %s75
    %p87 = scmp.eq.s32.totalorder %s18, 1
    %p88 = por %p86, %p87
    %p90 = scmp.ne.s32.totalorder %s75, %s89
    %p91 = scmp.eq.s32.totalorder %s18, 0
    %p92 = por %p90, %p91
    %s94 = sadd.s32 %s93, 1
    %p97 = scmp.eq.s32.totalorder %s12, 1
    %p98 = scmp.ne.s32.totalorder %s93, %s95
    %p99 = scmp.eq.s32.totalorder %s12, 0
    %p100 = por %p98, %p99
    %p101 = scmp.ne.s32.totalorder %s93, %s95
    %p102 = scmp.eq.s32.totalorder %s17, 1
    %p103 = por %p101, %p102
    %p104 = scmp.ne.s32.totalorder %s95, %s96
    %p105 = scmp.eq.s32.totalorder %s17, 0
    %p106 = por %p104, %p105
    %p107 = scmp.ne.s32.totalorder %s95, %s96
    %p108 = scmp.eq.s32.totalorder %s18, 1
    %p109 = por %p107, %p108
    %p111 = scmp.ne.s32.totalorder %s96, %s110
    %p112 = scmp.eq.s32.totalorder %s18, 0
    %p113 = por %p111, %p112
    %s115 = sadd.s32 %s114, 1
    %p118 = scmp.eq.s32.totalorder %s12, 1
    %p119 = scmp.ne.s32.totalorder %s114, %s116
    %p120 = scmp.eq.s32.totalorder %s12, 0
    %p121 = por %p119, %p120
    %p122 = scmp.ne.s32.totalorder %s114, %s116
    %p123 = scmp.eq.s32.totalorder %s17, 1
    %p124 = por %p122, %p123
    %p125 = scmp.ne.s32.totalorder %s116, %s117
    %p126 = scmp.eq.s32.totalorder %s17, 0
    %p127 = por %p125, %p126
    %p128 = scmp.ne.s32.totalorder %s116, %s117
    %p129 = scmp.eq.s32.totalorder %s18, 1
    %p130 = por %p128, %p129
    %p132 = scmp.ne.s32.totalorder %s117, %s131
    %p133 = scmp.eq.s32.totalorder %s18, 0
    %p134 = por %p132, %p133
    %s136 = sadd.s32 %s135, 1
    %p139 = scmp.eq.s32.totalorder %s12, 1
    %p140 = scmp.ne.s32.totalorder %s135, %s137
    %p141 = scmp.eq.s32.totalorder %s12, 0
    %p142 = por %p140, %p141
    %p143 = scmp.ne.s32.totalorder %s135, %s137
    %p144 = scmp.eq.s32.totalorder %s17, 1
    %p145 = por %p143, %p144
    %p146 = scmp.ne.s32.totalorder %s137, %s138
    %p147 = scmp.eq.s32.totalorder %s17, 0
    %p148 = por %p146, %p147
    %p149 = scmp.ne.s32.totalorder %s137, %s138
    %p150 = scmp.eq.s32.totalorder %s18, 1
    %p151 = por %p149, %p150
    %p153 = scmp.ne.s32.totalorder %s138, %s152
    %p154 = scmp.eq.s32.totalorder %s18, 0
    %p155 = por %p153, %p154
    %s156 = ssub.s32 %s12, %s19
    %p157 = scmp.eq.s32.totalorder %s156, 0
    %s159 = sadd.s32 %s158, 1
    %s160 = scalar_select %p157, %s158, %s159
    %p163 = pneg %p157
    %p164 = scmp.eq.s32.totalorder %s12, 1
    %p165 = por %p163, %p164
    %p166 = scmp.ne.s32.totalorder %s158, %s161
    %p167 = scmp.eq.s32.totalorder %s12, 0
    %p168 = por %p166, %p167
    %p169 = scmp.ne.s32.totalorder %s158, %s161
    %p170 = scmp.eq.s32.totalorder %s17, 1
    %p171 = por %p169, %p170
    %p172 = scmp.ne.s32.totalorder %s161, %s162
    %p173 = scmp.eq.s32.totalorder %s17, 0
    %p174 = por %p172, %p173
    %p175 = scmp.ne.s32.totalorder %s161, %s162
    %p176 = scmp.eq.s32.totalorder %s18, 1
    %p177 = por %p175, %p176
    %p179 = scmp.ne.s32.totalorder %s162, %s178
    %p180 = scmp.eq.s32.totalorder %s18, 0
    %p181 = por %p179, %p180
    %p182 = scmp.le.s32.totalorder 1, %s12
    %p183 = scmp.lt.s32.totalorder %s12, 3
    %p184 = pnand %p182, %p183
    %p185 = pneg %p184
    // Predicated region
    $region9: #{tpu_custom_call.1} parent=5 // pred_check
      _
    $region10: #{tpu_custom_call.1} parent=5 // pred_check_branch
      %187 = sbr.rel (%p184) target = $region12
    $region11: #{tpu_custom_call.1} parent=5 // pred_region
      %s188 = ssub.s32 %s12, 1
      // Predicated region
      $region13: #{tpu_custom_call.1} parent=11 // pred_check
        %p189 = pneg %p85
      $region14: #{tpu_custom_call.1} parent=11 // pred_check_branch
        %191 = sbr.rel (%p189) target = $region16
      $region15: #{tpu_custom_call.1} parent=11 // pred_region
        _
      $region16: #{tpu_custom_call.1} parent=11 // pred_fallthru
        _
      // Predicated region
      $region17: #{tpu_custom_call.1} parent=11 // pred_check
        %p192 = pneg %p106
      $region18: #{tpu_custom_call.1} parent=11 // pred_check_branch
        %194 = sbr.rel (%p192) target = $region20
      $region19: #{tpu_custom_call.1} parent=11 // pred_region
        _
      $region20: #{tpu_custom_call.1} parent=11 // pred_fallthru
        _
      // Predicated region
      $region21: #{tpu_custom_call.1} parent=11 // pred_check
        %p195 = pneg %p127
      $region22: #{tpu_custom_call.1} parent=11 // pred_check_branch
        %197 = sbr.rel (%p195) target = $region24
      $region23: #{tpu_custom_call.1} parent=11 // pred_region
        _
      $region24: #{tpu_custom_call.1} parent=11 // pred_fallthru
        _
      // Predicated region
      $region25: #{tpu_custom_call.1} parent=11 // pred_check
        %p198 = pneg %p148
      $region26: #{tpu_custom_call.1} parent=11 // pred_check_branch
        %200 = sbr.rel (%p198) target = $region28
      $region27: #{tpu_custom_call.1} parent=11 // pred_region
        _
      $region28: #{tpu_custom_call.1} parent=11 // pred_fallthru
        _
    $region12: #{tpu_custom_call.1} parent=5 // pred_fallthru
      _
    %p201 = scmp.lt.s32.totalorder %s12, 2
    // Predicated region
    $region29: #{tpu_custom_call.1} parent=5 // pred_check
      %p202 = pneg %p201
    $region30: #{tpu_custom_call.1} parent=5 // pred_check_branch
      %204 = sbr.rel (%p202) target = $region32
    $region31: #{tpu_custom_call.1} parent=5 // pred_region
      // Predicated region
      $region33: #{tpu_custom_call.1} parent=31 // pred_check
        %p205 = pneg %p32
      $region34: #{tpu_custom_call.1} parent=31 // pred_check_branch
        %207 = sbr.rel (%p205) target = $region36
      $region35: #{tpu_custom_call.1} parent=31 // pred_region
        %s208 = smul.u32 32, %s12
        %p209 = scmp.lt.s32.totalorder %s208, 63
        %s210 = scalar_select %p209, %s208, 63
        %s211 = smul.addr %s210, 8
        %s212 = scalar_lea.vmem %s0, %s211
        %s213 = smul.u32 32, %s12
      $region36: #{tpu_custom_call.1} parent=31 // pred_fallthru
        _
      // Predicated region
      $region37: #{tpu_custom_call.1} parent=31 // pred_check
        %p214 = pneg %p58
      $region38: #{tpu_custom_call.1} parent=31 // pred_check_branch
        %216 = sbr.rel (%p214) target = $region40
      $region39: #{tpu_custom_call.1} parent=31 // pred_region
        %s217 = smul.u32 32, %s12
        %p218 = scmp.lt.s32.totalorder %s217, 63
        %s219 = scalar_select %p218, %s217, 63
        %s220 = smul.addr %s219, 8
        %s221 = scalar_lea.vmem %s1, %s220
        %s222 = smul.u32 32, %s12
      $region40: #{tpu_custom_call.1} parent=31 // pred_fallthru
        _
    $region32: #{tpu_custom_call.1} parent=5 // pred_fallthru
      _
    %p223 = scmp.le.s32.totalorder 1, %s12
    %p224 = scmp.lt.s32.totalorder %s12, 3
    %p225 = pnand %p223, %p224
    %p226 = pneg %p225
    // Predicated region
    $region41: #{tpu_custom_call.1} parent=5 // pred_check
      _
    $region42: #{tpu_custom_call.1} parent=5 // pred_check_branch
      %228 = sbr.rel (%p225) target = $region44
    $region43: #{tpu_custom_call.1} parent=5 // pred_region
      %s229 = ssub.s32 %s12, 1
      %s230 = smul.u32 32, %s17
      %p231 = scmp.lt.s32.totalorder %s230, 63
      %s232 = scalar_select %p231, %s230, 63
      %s233 = smul.addr %s232, 8
      %s234 = scalar_lea.vmem %s0, %s233
      %p235 = pneg %p38
      %p236 = pneg %p35
      %s237 = smul.u32 32, %s17
      %p238 = scmp.lt.s32.totalorder %s237, 63
      %s239 = scalar_select %p238, %s237, 63
      %s240 = smul.addr %s239, 8
      %s241 = scalar_lea.vmem %s1, %s240
      %p242 = pneg %p64
      %p243 = pneg %p61
      %p244 = pneg %p85
      %p245 = pneg %p82
      %p246 = pneg %p106
      %p247 = pneg %p103
      %p248 = pneg %p127
      %p249 = pneg %p124
      %p250 = pneg %p148
      %p251 = pneg %p145
      %p252 = pneg %p174
      %p253 = pneg %p171
      %s254 = smul.u32 32, %s17
      %p255 = scmp.lt.s32.totalorder %s254, 63
      %s256 = scalar_select %p255, %s254, 63
      %s257 = smul.addr %s256, 8
      %s258 = scalar_lea.vmem %s6, %s257
      %s259 = smul.u32 32, %s17
      %p260 = scmp.lt.s32.totalorder %s259, 63
      %s261 = scalar_select %p260, %s259, 63
      %s262 = smul.addr %s261, 8
      %s263 = scalar_lea.vmem %s0, %s262
      %s264 = smul.u32 32, %s17
      %s265 = smul.u32 32, %s17
      %p266 = scmp.lt.s32.totalorder %s265, 63
      %s267 = scalar_select %p266, %s265, 63
      %s268 = smul.addr %s267, 8
      %s269 = scalar_lea.vmem %s1, %s268
      %s270 = smul.u32 32, %s17
      %s271 = smul.u32 32, %s17
      %p272 = scmp.lt.s32.totalorder %s271, 63
      %s273 = scalar_select %p272, %s271, 63
      %s274 = smul.addr %s273, 8
      %s275 = scalar_lea.vmem %s6, %s274
      %s276 = smul.u32 32, %s17
      %v277 = vld [vmem:[%s263] sm:$0xff]
      %v278 = vld [vmem:[%s263 + $0x8] sm:$0xff]
      %v279 = vld [vmem:[%s263 + $0x10] sm:$0xff]
      %v280 = vld [vmem:[%s263 + $0x18] sm:$0xff]
      %v281 = vld [vmem:[%s263 + $0x20] sm:$0xff]
      %v282 = vld [vmem:[%s263 + $0x28] sm:$0xff]
      %v283 = vld [vmem:[%s263 + $0x30] sm:$0xff]
      %v284 = vld [vmem:[%s263 + $0x38] sm:$0xff]
      %v285 = vld [vmem:[%s263 + $0x40] sm:$0xff]
      %v286 = vld [vmem:[%s263 + $0x48] sm:$0xff]
      %v287 = vld [vmem:[%s263 + $0x50] sm:$0xff]
      %v288 = vld [vmem:[%s263 + $0x58] sm:$0xff]
      %v289 = vld [vmem:[%s263 + $0x60] sm:$0xff]
      %v290 = vld [vmem:[%s263 + $0x68] sm:$0xff]
      %v291 = vld [vmem:[%s263 + $0x70] sm:$0xff]
      %v292 = vld [vmem:[%s263 + $0x78] sm:$0xff]
      %v293 = vld [vmem:[%s263 + $0x80] sm:$0xff]
      %v294 = vld [vmem:[%s263 + $0x88] sm:$0xff]
      %v295 = vld [vmem:[%s263 + $0x90] sm:$0xff]
      %v296 = vld [vmem:[%s263 + $0x98] sm:$0xff]
      %v297 = vld [vmem:[%s263 + $0xa0] sm:$0xff]
      %v298 = vld [vmem:[%s263 + $0xa8] sm:$0xff]
      %v299 = vld [vmem:[%s263 + $0xb0] sm:$0xff]
      %v300 = vld [vmem:[%s263 + $0xb8] sm:$0xff]
      %v301 = vld [vmem:[%s263 + $0xc0] sm:$0xff]
      %v302 = vld [vmem:[%s263 + $0xc8] sm:$0xff]
      %v303 = vld [vmem:[%s263 + $0xd0] sm:$0xff]
      %v304 = vld [vmem:[%s263 + $0xd8] sm:$0xff]
      %v305 = vld [vmem:[%s263 + $0xe0] sm:$0xff]
      %v306 = vld [vmem:[%s263 + $0xe8] sm:$0xff]
      %v307 = vld [vmem:[%s263 + $0xf0] sm:$0xff]
      %v308 = vld [vmem:[%s263 + $0xf8] sm:$0xff]
      %v309 = vld [vmem:[%s269] sm:$0xff]
      %v310 = vld [vmem:[%s269 + $0x8] sm:$0xff]
      %v311 = vld [vmem:[%s269 + $0x10] sm:$0xff]
      %v312 = vld [vmem:[%s269 + $0x18] sm:$0xff]
      %v313 = vld [vmem:[%s269 + $0x20] sm:$0xff]
      %v314 = vld [vmem:[%s269 + $0x28] sm:$0xff]
      %v315 = vld [vmem:[%s269 + $0x30] sm:$0xff]
      %v316 = vld [vmem:[%s269 + $0x38] sm:$0xff]
      %v317 = vld [vmem:[%s269 + $0x40] sm:$0xff]
      %v318 = vld [vmem:[%s269 + $0x48] sm:$0xff]
      %v319 = vld [vmem:[%s269 + $0x50] sm:$0xff]
      %v320 = vld [vmem:[%s269 + $0x58] sm:$0xff]
      %v321 = vld [vmem:[%s269 + $0x60] sm:$0xff]
      %v322 = vld [vmem:[%s269 + $0x68] sm:$0xff]
      %v323 = vld [vmem:[%s269 + $0x70] sm:$0xff]
      %v324 = vld [vmem:[%s269 + $0x78] sm:$0xff]
      %v325 = vld [vmem:[%s269 + $0x80] sm:$0xff]
      %v326 = vld [vmem:[%s269 + $0x88] sm:$0xff]
      %v327 = vld [vmem:[%s269 + $0x90] sm:$0xff]
      %v328 = vld [vmem:[%s269 + $0x98] sm:$0xff]
      %v329 = vld [vmem:[%s269 + $0xa0] sm:$0xff]
      %v330 = vld [vmem:[%s269 + $0xa8] sm:$0xff]
      %v331 = vld [vmem:[%s269 + $0xb0] sm:$0xff]
      %v332 = vld [vmem:[%s269 + $0xb8] sm:$0xff]
      %v333 = vld [vmem:[%s269 + $0xc0] sm:$0xff]
      %v334 = vld [vmem:[%s269 + $0xc8] sm:$0xff]
      %v335 = vld [vmem:[%s269 + $0xd0] sm:$0xff]
      %v336 = vld [vmem:[%s269 + $0xd8] sm:$0xff]
      %v337 = vld [vmem:[%s269 + $0xe0] sm:$0xff]
      %v338 = vld [vmem:[%s269 + $0xe8] sm:$0xff]
      %v339 = vld [vmem:[%s269 + $0xf0] sm:$0xff]
      %v340 = vld [vmem:[%s269 + $0xf8] sm:$0xff]
      %v341 = vld [vmem:[%s2] sm:$0xff]
      %v342 = vld [vmem:[%s2 + $0x8] sm:$0xff]
      %v343 = vld [vmem:[%s2 + $0x10] sm:$0xff]
      %v344 = vld [vmem:[%s2 + $0x18] sm:$0xff]
      %v345 = vld [vmem:[%s2 + $0x20] sm:$0xff]
      %v346 = vld [vmem:[%s2 + $0x28] sm:$0xff]
      %v347 = vld [vmem:[%s2 + $0x30] sm:$0xff]
      %v348 = vld [vmem:[%s2 + $0x38] sm:$0xff]
      %v349 = vld [vmem:[%s2 + $0x40] sm:$0xff]
      %v350 = vld [vmem:[%s2 + $0x48] sm:$0xff]
      %v351 = vld [vmem:[%s2 + $0x50] sm:$0xff]
      %v352 = vld [vmem:[%s2 + $0x58] sm:$0xff]
      %v353 = vld [vmem:[%s2 + $0x60] sm:$0xff]
      %v354 = vld [vmem:[%s2 + $0x68] sm:$0xff]
      %v355 = vld [vmem:[%s2 + $0x70] sm:$0xff]
      %v356 = vld [vmem:[%s2 + $0x78] sm:$0xff]
      %vm357 = vcmask 261120
      %v359 = vsel %vm357, %v309, 0
      %v362 = vsel %vm357, %v310, 0
      %v365 = vsel %vm357, %v311, 0
      %v368 = vsel %vm357, %v312, 0
      %v371 = vsel %vm357, %v313, 0
      %v374 = vsel %vm357, %v314, 0
      %v377 = vsel %vm357, %v315, 0
      %v380 = vsel %vm357, %v316, 0
      %v383 = vsel %vm357, %v317, 0
      %v386 = vsel %vm357, %v318, 0
      %v389 = vsel %vm357, %v319, 0
      %v392 = vsel %vm357, %v320, 0
      %v395 = vsel %vm357, %v321, 0
      %v398 = vsel %vm357, %v322, 0
      %v401 = vsel %vm357, %v323, 0
      %v404 = vsel %vm357, %v324, 0
      %v407 = vsel %vm357, %v325, 0
      %v410 = vsel %vm357, %v326, 0
      %v413 = vsel %vm357, %v327, 0
      %v416 = vsel %vm357, %v328, 0
      %v419 = vsel %vm357, %v329, 0
      %v422 = vsel %vm357, %v330, 0
      %v425 = vsel %vm357, %v331, 0
      %v428 = vsel %vm357, %v332, 0
      %v431 = vsel %vm357, %v333, 0
      %v434 = vsel %vm357, %v334, 0
      %v437 = vsel %vm357, %v335, 0
      %v440 = vsel %vm357, %v336, 0
      %v443 = vsel %vm357, %v337, 0
      %v446 = vsel %vm357, %v338, 0
      %v449 = vsel %vm357, %v339, 0
      %v452 = vsel %vm357, %v340, 0
      %454 = vmatprep.subr.mxu0 %v342
      %455 = vmatpush1.msra.mxu0 %v341
      %456 = vmatprep.subr.mxu0 %v346
      %457 = vmatpush1.msra.mxu0 %v345
      %458 = vmatprep.subr.mxu0 %v350
      %459 = vmatpush1.msra.mxu0 %v349
      %460 = vmatprep.subr.mxu0 %v354
      %461 = vmatpush1.msra.mxu0 %v353
      %462 = vmatprep.subr.mxu0 0.0
      %463 = vmatpush1.msra.mxu0 0.0
      %464 = vmatprep.subr.mxu0 0.0
      %465 = vmatpush1.msra.mxu0 0.0
      %466 = vmatprep.subr.mxu0 0.0
      %467 = vmatpush1.msra.mxu0 0.0
      %468 = vmatprep.subr.mxu0 0.0
      %469 = vmatpush1.msra.mxu0 0.0
      %470 = vmatprep.subr.mxu0 0.0
      %471 = vmatpush1.msra.mxu0 0.0
      %472 = vmatprep.subr.mxu0 0.0
      %473 = vmatpush1.msra.mxu0 0.0
      %474 = vmatprep.subr.mxu0 0.0
      %475 = vmatpush1.msra.mxu0 0.0
      %476 = vmatprep.subr.mxu0 0.0
      %477 = vmatpush1.msra.mxu0 0.0
      %478 = vmatprep.subr.mxu0 0.0
      %479 = vmatpush1.msra.mxu0 0.0
      %480 = vmatprep.subr.mxu0 0.0
      %481 = vmatpush1.msra.mxu0 0.0
      %482 = vmatprep.subr.mxu0 0.0
      %483 = vmatpush1.msra.mxu0 0.0
      %484 = vmatprep.subr.mxu0 0.0
      %485 = vmatpush1.msra.mxu0 0.0
      %486 = vmatprep.subr.mxu0 0.0
      %487 = vmatpush1.msra.mxu0 0.0
      %488 = vmatprep.subr.mxu0 0.0
      %489 = vmatpush1.msra.mxu0 0.0
      %490 = vmatprep.subr.mxu0 0.0
      %491 = vmatpush1.msra.mxu0 0.0
      %492 = vmatprep.subr.mxu0 0.0
      %493 = vmatpush1.msra.mxu0 0.0
      %494 = vmatprep.subr.mxu0 0.0
      %495 = vmatpush1.msra.mxu0 0.0
      %496 = vmatprep.subr.mxu0 0.0
      %497 = vmatpush1.msra.mxu0 0.0
      %498 = vmatprep.subr.mxu0 0.0
      %499 = vmatpush1.msra.mxu0 0.0
      %500 = vmatprep.subr.mxu0 0.0
      %501 = vmatpush1.msra.mxu0 0.0
      %502 = vmatprep.subr.mxu0 0.0
      %503 = vmatpush1.msra.mxu0 0.0
      %504 = vmatprep.subr.mxu0 0.0
      %505 = vmatpush1.msra.mxu0 0.0
      %506 = vmatprep.subr.mxu0 0.0
      %507 = vmatpush1.msra.mxu0 0.0
      %508 = vmatprep.subr.mxu0 0.0
      %509 = vmatpush1.msra.mxu0 0.0
      %510 = vmatprep.subr.mxu0 0.0
      %511 = vmatpush1.msra.mxu0 0.0
      %512 = vmatprep.subr.mxu0 0.0
      %513 = vmatpush1.msra.mxu0 0.0
      %514 = vmatprep.subr.mxu0 0.0
      %515 = vmatpush1.msra.mxu0 0.0
      %516 = vmatprep.subr.mxu0 0.0
      %517 = vmatpush1.msra.mxu0 0.0
      %518 = vmatprep.mubr.f32.mxu0 0.0
      %519 = vmatmul.mubr.f32.gmra.mrb[0].mxu0 %v359
      %v520 = vpop.f32.mrb[0].mxu0
      %v521 = vadd.f32 0.0, %v520
      %v522 = vpop.f32.mrb[0].mxu0
      %v523 = vadd.f32 0.0, %v522
      %524 = vmatprep.mubr.f32.mxu0 0.0
      %525 = vmatmul.mubr.f32.gmra.mrb[0].mxu0 %v362
      %v526 = vpop.f32.mrb[0].mxu0
      %v527 = vadd.f32 0.0, %v526
      %v528 = vpop.f32.mrb[0].mxu0
      %v529 = vadd.f32 0.0, %v528
      %530 = vmatprep.mubr.f32.mxu0 0.0
      %531 = vmatmul.mubr.f32.gmra.mrb[0].mxu0 %v365
      %v532 = vpop.f32.mrb[0].mxu0
      %v533 = vadd.f32 0.0, %v532
      %v534 = vpop.f32.mrb[0].mxu0
      %v535 = vadd.f32 0.0, %v534
      %536 = vmatprep.mubr.f32.mxu0 0.0
      %537 = vmatmul.mubr.f32.gmra.mrb[0].mxu0 %v368
      %v538 = vpop.f32.mrb[0].mxu0
      %v539 = vadd.f32 0.0, %v538
      %v540 = vpop.f32.mrb[0].mxu0
      %v541 = vadd.f32 0.0, %v540
      %542 = vmatprep.mubr.f32.mxu0 0.0
      %543 = vmatmul.mubr.f32.gmra.mrb[0].mxu0 %v371
      %v544 = vpop.f32.mrb[0].mxu0
      %v545 = vadd.f32 0.0, %v544
      %v546 = vpop.f32.mrb[0].mxu0
      %v547 = vadd.f32 0.0, %v546
      %548 = vmatprep.mubr.f32.mxu0 0.0
      %549 = vmatmul.mubr.f32.gmra.mrb[0].mxu0 %v374
      %v550 = vpop.f32.mrb[0].mxu0
      %v551 = vadd.f32 0.0, %v550
      %v552 = vpop.f32.mrb[0].mxu0
      %v553 = vadd.f32 0.0, %v552
      %554 = vmatprep.mubr.f32.mxu0 0.0
      %555 = vmatmul.mubr.f32.gmra.mrb[0].mxu0 %v377
      %v556 = vpop.f32.mrb[0].mxu0
      %v557 = vadd.f32 0.0, %v556
      %v558 = vpop.f32.mrb[0].mxu0
      %v559 = vadd.f32 0.0, %v558
      %560 = vmatprep.mubr.f32.mxu0 0.0
      %561 = vmatmul.mubr.f32.gmra.mrb[0].mxu0 %v380
      %v562 = vpop.f32.mrb[0].mxu0
      %v563 = vadd.f32 0.0, %v562
      %v564 = vpop.f32.mrb[0].mxu0
      %v565 = vadd.f32 0.0, %v564
      %566 = vmatprep.mubr.f32.mxu0 0.0
      %567 = vmatmul.mubr.f32.gmra.mrb[0].mxu0 %v383
      %v568 = vpop.f32.mrb[0].mxu0
      %v569 = vadd.f32 0.0, %v568
      %v570 = vpop.f32.mrb[0].mxu0
      %v571 = vadd.f32 0.0, %v570
      %572 = vmatprep.mubr.f32.mxu0 0.0
      %573 = vmatmul.mubr.f32.gmra.mrb[0].mxu0 %v386
      %v574 = vpop.f32.mrb[0].mxu0
      %v575 = vadd.f32 0.0, %v574
      %v576 = vpop.f32.mrb[0].mxu0
      %v577 = vadd.f32 0.0, %v576
      %578 = vmatprep.mubr.f32.mxu0 0.0
      %579 = vmatmul.mubr.f32.gmra.mrb[0].mxu0 %v389
      %v580 = vpop.f32.mrb[0].mxu0
      %v581 = vadd.f32 0.0, %v580
      %v582 = vpop.f32.mrb[0].mxu0
      %v583 = vadd.f32 0.0, %v582
      %584 = vmatprep.mubr.f32.mxu0 0.0
      %585 = vmatmul.mubr.f32.gmra.mrb[0].mxu0 %v392
      %v586 = vpop.f32.mrb[0].mxu0
      %v587 = vadd.f32 0.0, %v586
      %v588 = vpop.f32.mrb[0].mxu0
      %v589 = vadd.f32 0.0, %v588
      %590 = vmatprep.mubr.f32.mxu0 0.0
      %591 = vmatmul.mubr.f32.gmra.mrb[0].mxu0 %v395
      %v592 = vpop.f32.mrb[0].mxu0
      %v593 = vadd.f32 0.0, %v592
      %v594 = vpop.f32.mrb[0].mxu0
      %v595 = vadd.f32 0.0, %v594
      %596 = vmatprep.mubr.f32.mxu0 0.0
      %597 = vmatmul.mubr.f32.gmra.mrb[0].mxu0 %v398
      %v598 = vpop.f32.mrb[0].mxu0
      %v599 = vadd.f32 0.0, %v598
      %v600 = vpop.f32.mrb[0].mxu0
      %v601 = vadd.f32 0.0, %v600
      %602 = vmatprep.mubr.f32.mxu0 0.0
      %603 = vmatmul.mubr.f32.gmra.mrb[0].mxu0 %v401
      %v604 = vpop.f32.mrb[0].mxu0
      %v605 = vadd.f32 0.0, %v604
      %v606 = vpop.f32.mrb[0].mxu0
      %v607 = vadd.f32 0.0, %v606
      %608 = vmatprep.mubr.f32.mxu0 0.0
      %609 = vmatmul.mubr.f32.gmra.mrb[0].mxu0 %v404
      %v610 = vpop.f32.mrb[0].mxu0
      %v611 = vadd.f32 0.0, %v610
      %v612 = vpop.f32.mrb[0].mxu0
      %v613 = vadd.f32 0.0, %v612
      %614 = vmatprep.mubr.f32.mxu0 0.0
      %615 = vmatmul.mubr.f32.gmra.mrb[0].mxu0 %v407
      %v616 = vpop.f32.mrb[0].mxu0
      %v617 = vadd.f32 0.0, %v616
      %v618 = vpop.f32.mrb[0].mxu0
      %v619 = vadd.f32 0.0, %v618
      %620 = vmatprep.mubr.f32.mxu0 0.0
      %621 = vmatmul.mubr.f32.gmra.mrb[0].mxu0 %v410
      %v622 = vpop.f32.mrb[0].mxu0
      %v623 = vadd.f32 0.0, %v622
      %v624 = vpop.f32.mrb[0].mxu0
      %v625 = vadd.f32 0.0, %v624
      %626 = vmatprep.mubr.f32.mxu0 0.0
      %627 = vmatmul.mubr.f32.gmra.mrb[0].mxu0 %v413
      %v628 = vpop.f32.mrb[0].mxu0
      %v629 = vadd.f32 0.0, %v628
      %v630 = vpop.f32.mrb[0].mxu0
      %v631 = vadd.f32 0.0, %v630
      %632 = vmatprep.mubr.f32.mxu0 0.0
      %633 = vmatmul.mubr.f32.gmra.mrb[0].mxu0 %v416
      %v634 = vpop.f32.mrb[0].mxu0
      %v635 = vadd.f32 0.0, %v634
      %v636 = vpop.f32.mrb[0].mxu0
      %v637 = vadd.f32 0.0, %v636
      %638 = vmatprep.mubr.f32.mxu0 0.0
      %639 = vmatmul.mubr.f32.gmra.mrb[0].mxu0 %v419
      %v640 = vpop.f32.mrb[0].mxu0
      %v641 = vadd.f32 0.0, %v640
      %v642 = vpop.f32.mrb[0].mxu0
      %v643 = vadd.f32 0.0, %v642
      %644 = vmatprep.mubr.f32.mxu0 0.0
      %645 = vmatmul.mubr.f32.gmra.mrb[0].mxu0 %v422
      %v646 = vpop.f32.mrb[0].mxu0
      %v647 = vadd.f32 0.0, %v646
      %v648 = vpop.f32.mrb[0].mxu0
      %v649 = vadd.f32 0.0, %v648
      %650 = vmatprep.mubr.f32.mxu0 0.0
      %651 = vmatmul.mubr.f32.gmra.mrb[0].mxu0 %v425
      %v652 = vpop.f32.mrb[0].mxu0
      %v653 = vadd.f32 0.0, %v652
      %v654 = vpop.f32.mrb[0].mxu0
      %v655 = vadd.f32 0.0, %v654
      %656 = vmatprep.mubr.f32.mxu0 0.0
      %657 = vmatmul.mubr.f32.gmra.mrb[0].mxu0 %v428
      %v658 = vpop.f32.mrb[0].mxu0
      %v659 = vadd.f32 0.0, %v658
      %v660 = vpop.f32.mrb[0].mxu0
      %v661 = vadd.f32 0.0, %v660
      %662 = vmatprep.mubr.f32.mxu0 0.0
      %663 = vmatmul.mubr.f32.gmra.mrb[0].mxu0 %v431
      %v664 = vpop.f32.mrb[0].mxu0
      %v665 = vadd.f32 0.0, %v664
      %v666 = vpop.f32.mrb[0].mxu0
      %v667 = vadd.f32 0.0, %v666
      %668 = vmatprep.mubr.f32.mxu0 0.0
      %669 = vmatmul.mubr.f32.gmra.mrb[0].mxu0 %v434
      %v670 = vpop.f32.mrb[0].mxu0
      %v671 = vadd.f32 0.0, %v670
      %v672 = vpop.f32.mrb[0].mxu0
      %v673 = vadd.f32 0.0, %v672
      %674 = vmatprep.mubr.f32.mxu0 0.0
      %675 = vmatmul.mubr.f32.gmra.mrb[0].mxu0 %v437
      %v676 = vpop.f32.mrb[0].mxu0
      %v677 = vadd.f32 0.0, %v676
      %v678 = vpop.f32.mrb[0].mxu0
      %v679 = vadd.f32 0.0, %v678
      %680 = vmatprep.mubr.f32.mxu0 0.0
      %681 = vmatmul.mubr.f32.gmra.mrb[0].mxu0 %v440
      %v682 = vpop.f32.mrb[0].mxu0
      %v683 = vadd.f32 0.0, %v682
      %v684 = vpop.f32.mrb[0].mxu0
      %v685 = vadd.f32 0.0, %v684
      %686 = vmatprep.mubr.f32.mxu0 0.0
      %687 = vmatmul.mubr.f32.gmra.mrb[0].mxu0 %v443
      %v688 = vpop.f32.mrb[0].mxu0
      %v689 = vadd.f32 0.0, %v688
      %v690 = vpop.f32.mrb[0].mxu0
      %v691 = vadd.f32 0.0, %v690
      %692 = vmatprep.mubr.f32.mxu0 0.0
      %693 = vmatmul.mubr.f32.gmra.mrb[0].mxu0 %v446
      %v694 = vpop.f32.mrb[0].mxu0
      %v695 = vadd.f32 0.0, %v694
      %v696 = vpop.f32.mrb[0].mxu0
      %v697 = vadd.f32 0.0, %v696
      %698 = vmatprep.mubr.f32.mxu0 0.0
      %699 = vmatmul.mubr.f32.gmra.mrb[0].mxu0 %v449
      %v700 = vpop.f32.mrb[0].mxu0
      %v701 = vadd.f32 0.0, %v700
      %v702 = vpop.f32.mrb[0].mxu0
      %v703 = vadd.f32 0.0, %v702
      %704 = vmatprep.mubr.f32.mxu0 0.0
      %705 = vmatmul.mubr.f32.gmra.mrb[0].mxu0 %v452
      %v706 = vpop.f32.mrb[0].mxu0
      %v707 = vadd.f32 0.0, %v706
      %v708 = vpop.f32.mrb[0].mxu0
      %v709 = vadd.f32 0.0, %v708
      %710 = vdwg.mxu0
      %711 = vmatprep.subr.mxu0 %v344
      %712 = vmatpush1.msra.mxu0 %v343
      %713 = vmatprep.subr.mxu0 %v348
      %714 = vmatpush1.msra.mxu0 %v347
      %715 = vmatprep.subr.mxu0 %v352
      %716 = vmatpush1.msra.mxu0 %v351
      %717 = vmatprep.subr.mxu0 %v356
      %718 = vmatpush1.msra.mxu0 %v355
      %719 = vmatprep.subr.mxu0 0.0
      %720 = vmatpush1.msra.mxu0 0.0
      %721 = vmatprep.subr.mxu0 0.0
      %722 = vmatpush1.msra.mxu0 0.0
      %723 = vmatprep.subr.mxu0 0.0
      %724 = vmatpush1.msra.mxu0 0.0
      %725 = vmatprep.subr.mxu0 0.0
      %726 = vmatpush1.msra.mxu0 0.0
      %727 = vmatprep.subr.mxu0 0.0
      %728 = vmatpush1.msra.mxu0 0.0
      %729 = vmatprep.subr.mxu0 0.0
      %730 = vmatpush1.msra.mxu0 0.0
      %731 = vmatprep.subr.mxu0 0.0
      %732 = vmatpush1.msra.mxu0 0.0
      %733 = vmatprep.subr.mxu0 0.0
      %734 = vmatpush1.msra.mxu0 0.0
      %735 = vmatprep.subr.mxu0 0.0
      %736 = vmatpush1.msra.mxu0 0.0
      %737 = vmatprep.subr.mxu0 0.0
      %738 = vmatpush1.msra.mxu0 0.0
      %739 = vmatprep.subr.mxu0 0.0
      %740 = vmatpush1.msra.mxu0 0.0
      %741 = vmatprep.subr.mxu0 0.0
      %742 = vmatpush1.msra.mxu0 0.0
      %743 = vmatprep.subr.mxu0 0.0
      %744 = vmatpush1.msra.mxu0 0.0
      %745 = vmatprep.subr.mxu0 0.0
      %746 = vmatpush1.msra.mxu0 0.0
      %747 = vmatprep.subr.mxu0 0.0
      %748 = vmatpush1.msra.mxu0 0.0
      %749 = vmatprep.subr.mxu0 0.0
      %750 = vmatpush1.msra.mxu0 0.0
      %751 = vmatprep.subr.mxu0 0.0
      %752 = vmatpush1.msra.mxu0 0.0
      %753 = vmatprep.subr.mxu0 0.0
      %754 = vmatpush1.msra.mxu0 0.0
      %755 = vmatprep.subr.mxu0 0.0
      %756 = vmatpush1.msra.mxu0 0.0
      %757 = vmatprep.subr.mxu0 0.0
      %758 = vmatpush1.msra.mxu0 0.0
      %759 = vmatprep.subr.mxu0 0.0
      %760 = vmatpush1.msra.mxu0 0.0
      %761 = vmatprep.subr.mxu0 0.0
      %762 = vmatpush1.msra.mxu0 0.0
      %763 = vmatprep.subr.mxu0 0.0
      %764 = vmatpush1.msra.mxu0 0.0
      %765 = vmatprep.subr.mxu0 0.0
      %766 = vmatpush1.msra.mxu0 0.0
      %767 = vmatprep.subr.mxu0 0.0
      %768 = vmatpush1.msra.mxu0 0.0
      %769 = vmatprep.subr.mxu0 0.0
      %770 = vmatpush1.msra.mxu0 0.0
      %771 = vmatprep.subr.mxu0 0.0
      %772 = vmatpush1.msra.mxu0 0.0
      %773 = vmatprep.subr.mxu0 0.0
      %774 = vmatpush1.msra.mxu0 0.0
      %775 = vmatprep.mubr.f32.mxu0 0.0
      %776 = vmatmul.mubr.f32.gmra.mrb[0].mxu0 %v359
      %v777 = vpop.f32.mrb[0].mxu0
      %v778 = vadd.f32 0.0, %v777
      %v779 = vpop.f32.mrb[0].mxu0
      %v780 = vadd.f32 0.0, %v779
      %781 = vmatprep.mubr.f32.mxu0 0.0
      %782 = vmatmul.mubr.f32.gmra.mrb[0].mxu0 %v362
      %v783 = vpop.f32.mrb[0].mxu0
      %v784 = vadd.f32 0.0, %v783
      %v785 = vpop.f32.mrb[0].mxu0
      %v786 = vadd.f32 0.0, %v785
      %787 = vmatprep.mubr.f32.mxu0 0.0
      %788 = vmatmul.mubr.f32.gmra.mrb[0].mxu0 %v365
      %v789 = vpop.f32.mrb[0].mxu0
      %v790 = vadd.f32 0.0, %v789
      %v791 = vpop.f32.mrb[0].mxu0
      %v792 = vadd.f32 0.0, %v791
      %793 = vmatprep.mubr.f32.mxu0 0.0
      %794 = vmatmul.mubr.f32.gmra.mrb[0].mxu0 %v368
      %v795 = vpop.f32.mrb[0].mxu0
      %v796 = vadd.f32 0.0, %v795
      %v797 = vpop.f32.mrb[0].mxu0
      %v798 = vadd.f32 0.0, %v797
      %799 = vmatprep.mubr.f32.mxu0 0.0
      %800 = vmatmul.mubr.f32.gmra.mrb[0].mxu0 %v371
      %v801 = vpop.f32.mrb[0].mxu0
      %v802 = vadd.f32 0.0, %v801
      %v803 = vpop.f32.mrb[0].mxu0
      %v804 = vadd.f32 0.0, %v803
      %805 = vmatprep.mubr.f32.mxu0 0.0
      %806 = vmatmul.mubr.f32.gmra.mrb[0].mxu0 %v374
      %v807 = vpop.f32.mrb[0].mxu0
      %v808 = vadd.f32 0.0, %v807
      %v809 = vpop.f32.mrb[0].mxu0
      %v810 = vadd.f32 0.0, %v809
      %811 = vmatprep.mubr.f32.mxu0 0.0
      %812 = vmatmul.mubr.f32.gmra.mrb[0].mxu0 %v377
      %v813 = vpop.f32.mrb[0].mxu0
      %v814 = vadd.f32 0.0, %v813
      %v815 = vpop.f32.mrb[0].mxu0
      %v816 = vadd.f32 0.0, %v815
      %817 = vmatprep.mubr.f32.mxu0 0.0
      %818 = vmatmul.mubr.f32.gmra.mrb[0].mxu0 %v380
      %v819 = vpop.f32.mrb[0].mxu0
      %v820 = vadd.f32 0.0, %v819
      %v821 = vpop.f32.mrb[0].mxu0
      %v822 = vadd.f32 0.0, %v821
      %823 = vmatprep.mubr.f32.mxu0 0.0
      %824 = vmatmul.mubr.f32.gmra.mrb[0].mxu0 %v383
      %v825 = vpop.f32.mrb[0].mxu0
      %v826 = vadd.f32 0.0, %v825
      %v827 = vpop.f32.mrb[0].mxu0
      %v828 = vadd.f32 0.0, %v827
      %829 = vmatprep.mubr.f32.mxu0 0.0
      %830 = vmatmul.mubr.f32.gmra.mrb[0].mxu0 %v386
      %v831 = vpop.f32.mrb[0].mxu0
      %v832 = vadd.f32 0.0, %v831
      %v833 = vpop.f32.mrb[0].mxu0
      %v834 = vadd.f32 0.0, %v833
      %835 = vmatprep.mubr.f32.mxu0 0.0
      %836 = vmatmul.mubr.f32.gmra.mrb[0].mxu0 %v389
      %v837 = vpop.f32.mrb[0].mxu0
      %v838 = vadd.f32 0.0, %v837
      %v839 = vpop.f32.mrb[0].mxu0
      %v840 = vadd.f32 0.0, %v839
      %841 = vmatprep.mubr.f32.mxu0 0.0
      %842 = vmatmul.mubr.f32.gmra.mrb[0].mxu0 %v392
      %v843 = vpop.f32.mrb[0].mxu0
      %v844 = vadd.f32 0.0, %v843
      %v845 = vpop.f32.mrb[0].mxu0
      %v846 = vadd.f32 0.0, %v845
      %847 = vmatprep.mubr.f32.mxu0 0.0
      %848 = vmatmul.mubr.f32.gmra.mrb[0].mxu0 %v395
      %v849 = vpop.f32.mrb[0].mxu0
      %v850 = vadd.f32 0.0, %v849
      %v851 = vpop.f32.mrb[0].mxu0
      %v852 = vadd.f32 0.0, %v851
      %853 = vmatprep.mubr.f32.mxu0 0.0
      %854 = vmatmul.mubr.f32.gmra.mrb[0].mxu0 %v398
      %v855 = vpop.f32.mrb[0].mxu0
      %v856 = vadd.f32 0.0, %v855
      %v857 = vpop.f32.mrb[0].mxu0
      %v858 = vadd.f32 0.0, %v857
      %859 = vmatprep.mubr.f32.mxu0 0.0
      %860 = vmatmul.mubr.f32.gmra.mrb[0].mxu0 %v401
      %v861 = vpop.f32.mrb[0].mxu0
      %v862 = vadd.f32 0.0, %v861
      %v863 = vpop.f32.mrb[0].mxu0
      %v864 = vadd.f32 0.0, %v863
      %865 = vmatprep.mubr.f32.mxu0 0.0
      %866 = vmatmul.mubr.f32.gmra.mrb[0].mxu0 %v404
      %v867 = vpop.f32.mrb[0].mxu0
      %v868 = vadd.f32 0.0, %v867
      %v869 = vpop.f32.mrb[0].mxu0
      %v870 = vadd.f32 0.0, %v869
      %871 = vmatprep.mubr.f32.mxu0 0.0
      %872 = vmatmul.mubr.f32.gmra.mrb[0].mxu0 %v407
      %v873 = vpop.f32.mrb[0].mxu0
      %v874 = vadd.f32 0.0, %v873
      %v875 = vpop.f32.mrb[0].mxu0
      %v876 = vadd.f32 0.0, %v875
      %877 = vmatprep.mubr.f32.mxu0 0.0
      %878 = vmatmul.mubr.f32.gmra.mrb[0].mxu0 %v410
      %v879 = vpop.f32.mrb[0].mxu0
      %v880 = vadd.f32 0.0, %v879
      %v881 = vpop.f32.mrb[0].mxu0
      %v882 = vadd.f32 0.0, %v881
      %883 = vmatprep.mubr.f32.mxu0 0.0
      %884 = vmatmul.mubr.f32.gmra.mrb[0].mxu0 %v413
      %v885 = vpop.f32.mrb[0].mxu0
      %v886 = vadd.f32 0.0, %v885
      %v887 = vpop.f32.mrb[0].mxu0
      %v888 = vadd.f32 0.0, %v887
      %889 = vmatprep.mubr.f32.mxu0 0.0
      %890 = vmatmul.mubr.f32.gmra.mrb[0].mxu0 %v416
      %v891 = vpop.f32.mrb[0].mxu0
      %v892 = vadd.f32 0.0, %v891
      %v893 = vpop.f32.mrb[0].mxu0
      %v894 = vadd.f32 0.0, %v893
      %895 = vmatprep.mubr.f32.mxu0 0.0
      %896 = vmatmul.mubr.f32.gmra.mrb[0].mxu0 %v419
      %v897 = vpop.f32.mrb[0].mxu0
      %v898 = vadd.f32 0.0, %v897
      %v899 = vpop.f32.mrb[0].mxu0
      %v900 = vadd.f32 0.0, %v899
      %901 = vmatprep.mubr.f32.mxu0 0.0
      %902 = vmatmul.mubr.f32.gmra.mrb[0].mxu0 %v422
      %v903 = vpop.f32.mrb[0].mxu0
      %v904 = vadd.f32 0.0, %v903
      %v905 = vpop.f32.mrb[0].mxu0
      %v906 = vadd.f32 0.0, %v905
      %907 = vmatprep.mubr.f32.mxu0 0.0
      %908 = vmatmul.mubr.f32.gmra.mrb[0].mxu0 %v425
      %v909 = vpop.f32.mrb[0].mxu0
      %v910 = vadd.f32 0.0, %v909
      %v911 = vpop.f32.mrb[0].mxu0
      %v912 = vadd.f32 0.0, %v911
      %913 = vmatprep.mubr.f32.mxu0 0.0
      %914 = vmatmul.mubr.f32.gmra.mrb[0].mxu0 %v428
      %v915 = vpop.f32.mrb[0].mxu0
      %v916 = vadd.f32 0.0, %v915
      %v917 = vpop.f32.mrb[0].mxu0
      %v918 = vadd.f32 0.0, %v917
      %919 = vmatprep.mubr.f32.mxu0 0.0
      %920 = vmatmul.mubr.f32.gmra.mrb[0].mxu0 %v431
      %v921 = vpop.f32.mrb[0].mxu0
      %v922 = vadd.f32 0.0, %v921
      %v923 = vpop.f32.mrb[0].mxu0
      %v924 = vadd.f32 0.0, %v923
      %925 = vmatprep.mubr.f32.mxu0 0.0
      %926 = vmatmul.mubr.f32.gmra.mrb[0].mxu0 %v434
      %v927 = vpop.f32.mrb[0].mxu0
      %v928 = vadd.f32 0.0, %v927
      %v929 = vpop.f32.mrb[0].mxu0
      %v930 = vadd.f32 0.0, %v929
      %931 = vmatprep.mubr.f32.mxu0 0.0
      %932 = vmatmul.mubr.f32.gmra.mrb[0].mxu0 %v437
      %v933 = vpop.f32.mrb[0].mxu0
      %v934 = vadd.f32 0.0, %v933
      %v935 = vpop.f32.mrb[0].mxu0
      %v936 = vadd.f32 0.0, %v935
      %937 = vmatprep.mubr.f32.mxu0 0.0
      %938 = vmatmul.mubr.f32.gmra.mrb[0].mxu0 %v440
      %v939 = vpop.f32.mrb[0].mxu0
      %v940 = vadd.f32 0.0, %v939
      %v941 = vpop.f32.mrb[0].mxu0
      %v942 = vadd.f32 0.0, %v941
      %943 = vmatprep.mubr.f32.mxu0 0.0
      %944 = vmatmul.mubr.f32.gmra.mrb[0].mxu0 %v443
      %v945 = vpop.f32.mrb[0].mxu0
      %v946 = vadd.f32 0.0, %v945
      %v947 = vpop.f32.mrb[0].mxu0
      %v948 = vadd.f32 0.0, %v947
      %949 = vmatprep.mubr.f32.mxu0 0.0
      %950 = vmatmul.mubr.f32.gmra.mrb[0].mxu0 %v446
      %v951 = vpop.f32.mrb[0].mxu0
      %v952 = vadd.f32 0.0, %v951
      %v953 = vpop.f32.mrb[0].mxu0
      %v954 = vadd.f32 0.0, %v953
      %955 = vmatprep.mubr.f32.mxu0 0.0
      %956 = vmatmul.mubr.f32.gmra.mrb[0].mxu0 %v449
      %v957 = vpop.f32.mrb[0].mxu0
      %v958 = vadd.f32 0.0, %v957
      %v959 = vpop.f32.mrb[0].mxu0
      %v960 = vadd.f32 0.0, %v959
      %961 = vmatprep.mubr.f32.mxu0 0.0
      %962 = vmatmul.mubr.f32.gmra.mrb[0].mxu0 %v452
      %v963 = vpop.f32.mrb[0].mxu0
      %v964 = vadd.f32 0.0, %v963
      %v965 = vpop.f32.mrb[0].mxu0
      %v966 = vadd.f32 0.0, %v965
      %967 = vdwg.mxu0
      %v968 = vld [vmem:[%s3] sm:$0xff]
      %v969 = vld [vmem:[%s3 + $0x8] sm:$0xff]
      %v970 = vld [vmem:[%s3 + $0x10] sm:$0xff]
      %v971 = vld [vmem:[%s3 + $0x18] sm:$0xff]
      %v972 = vld [vmem:[%s3 + $0x20] sm:$0xff]
      %v973 = vld [vmem:[%s3 + $0x28] sm:$0xff]
      %v974 = vld [vmem:[%s3 + $0x30] sm:$0xff]
      %v975 = vld [vmem:[%s3 + $0x38] sm:$0xff]
      %v976 = vld [vmem:[%s3 + $0x40] sm:$0xff]
      %v977 = vld [vmem:[%s3 + $0x48] sm:$0xff]
      %v978 = vld [vmem:[%s3 + $0x50] sm:$0xff]
      %v979 = vld [vmem:[%s3 + $0x58] sm:$0xff]
      %v980 = vld [vmem:[%s3 + $0x60] sm:$0xff]
      %v981 = vld [vmem:[%s3 + $0x68] sm:$0xff]
      %v982 = vld [vmem:[%s3 + $0x70] sm:$0xff]
      %v983 = vld [vmem:[%s3 + $0x78] sm:$0xff]
      %v985 = vsel %vm357, %v277, 0
      %v988 = vsel %vm357, %v278, 0
      %v991 = vsel %vm357, %v279, 0
      %v994 = vsel %vm357, %v280, 0
      %v997 = vsel %vm357, %v281, 0
      %v1000 = vsel %vm357, %v282, 0
      %v1003 = vsel %vm357, %v283, 0
      %v1006 = vsel %vm357, %v284, 0
      %v1009 = vsel %vm357, %v285, 0
      %v1012 = vsel %vm357, %v286, 0
      %v1015 = vsel %vm357, %v287, 0
      %v1018 = vsel %vm357, %v288, 0
      %v1021 = vsel %vm357, %v289, 0
      %v1024 = vsel %vm357, %v290, 0
      %v1027 = vsel %vm357, %v291, 0
      %v1030 = vsel %vm357, %v292, 0
      %v1033 = vsel %vm357, %v293, 0
      %v1036 = vsel %vm357, %v294, 0
      %v1039 = vsel %vm357, %v295, 0
      %v1042 = vsel %vm357, %v296, 0
      %v1045 = vsel %vm357, %v297, 0
      %v1048 = vsel %vm357, %v298, 0
      %v1051 = vsel %vm357, %v299, 0
      %v1054 = vsel %vm357, %v300, 0
      %v1057 = vsel %vm357, %v301, 0
      %v1060 = vsel %vm357, %v302, 0
      %v1063 = vsel %vm357, %v303, 0
      %v1066 = vsel %vm357, %v304, 0
      %v1069 = vsel %vm357, %v305, 0
      %v1072 = vsel %vm357, %v306, 0
      %v1075 = vsel %vm357, %v307, 0
      %v1078 = vsel %vm357, %v308, 0
      %1080 = vmatprep.subr.mxu0 %v969
      %1081 = vmatpush1.msra.mxu0 %v968
      %1082 = vmatprep.subr.mxu0 %v973
      %1083 = vmatpush1.msra.mxu0 %v972
      %1084 = vmatprep.subr.mxu0 %v977
      %1085 = vmatpush1.msra.mxu0 %v976
      %1086 = vmatprep.subr.mxu0 %v981
      %1087 = vmatpush1.msra.mxu0 %v980
      %1088 = vmatprep.subr.mxu0 0.0
      %1089 = vmatpush1.msra.mxu0 0.0
      %1090 = vmatprep.subr.mxu0 0.0
      %1091 = vmatpush1.msra.mxu0 0.0
      %1092 = vmatprep.subr.mxu0 0.0
      %1093 = vmatpush1.msra.mxu0 0.0
      %1094 = vmatprep.subr.mxu0 0.0
      %1095 = vmatpush1.msra.mxu0 0.0
      %1096 = vmatprep.subr.mxu0 0.0
      %1097 = vmatpush1.msra.mxu0 0.0
      %1098 = vmatprep.subr.mxu0 0.0
      %1099 = vmatpush1.msra.mxu0 0.0
      %1100 = vmatprep.subr.mxu0 0.0
      %1101 = vmatpush1.msra.mxu0 0.0
      %1102 = vmatprep.subr.mxu0 0.0
      %1103 = vmatpush1.msra.mxu0 0.0
      %1104 = vmatprep.subr.mxu0 0.0
      %1105 = vmatpush1.msra.mxu0 0.0
      %1106 = vmatprep.subr.mxu0 0.0
      %1107 = vmatpush1.msra.mxu0 0.0
      %1108 = vmatprep.subr.mxu0 0.0
      %1109 = vmatpush1.msra.mxu0 0.0
      %1110 = vmatprep.subr.mxu0 0.0
      %1111 = vmatpush1.msra.mxu0 0.0
      %1112 = vmatprep.subr.mxu0 0.0
      %1113 = vmatpush1.msra.mxu0 0.0
      %1114 = vmatprep.subr.mxu0 0.0
      %1115 = vmatpush1.msra.mxu0 0.0
      %1116 = vmatprep.subr.mxu0 0.0
      %1117 = vmatpush1.msra.mxu0 0.0
      %1118 = vmatprep.subr.mxu0 0.0
      %1119 = vmatpush1.msra.mxu0 0.0
      %1120 = vmatprep.subr.mxu0 0.0
      %1121 = vmatpush1.msra.mxu0 0.0
      %1122 = vmatprep.subr.mxu0 0.0
      %1123 = vmatpush1.msra.mxu0 0.0
      %1124 = vmatprep.subr.mxu0 0.0
      %1125 = vmatpush1.msra.mxu0 0.0
      %1126 = vmatprep.subr.mxu0 0.0
      %1127 = vmatpush1.msra.mxu0 0.0
      %1128 = vmatprep.subr.mxu0 0.0
      %1129 = vmatpush1.msra.mxu0 0.0
      %1130 = vmatprep.subr.mxu0 0.0
      %1131 = vmatpush1.msra.mxu0 0.0
      %1132 = vmatprep.subr.mxu0 0.0
      %1133 = vmatpush1.msra.mxu0 0.0
      %1134 = vmatprep.subr.mxu0 0.0
      %1135 = vmatpush1.msra.mxu0 0.0
      %1136 = vmatprep.subr.mxu0 0.0
      %1137 = vmatpush1.msra.mxu0 0.0
      %1138 = vmatprep.subr.mxu0 0.0
      %1139 = vmatpush1.msra.mxu0 0.0
      %1140 = vmatprep.subr.mxu0 0.0
      %1141 = vmatpush1.msra.mxu0 0.0
      %1142 = vmatprep.subr.mxu0 0.0
      %1143 = vmatpush1.msra.mxu0 0.0
      %1144 = vmatprep.mubr.f32.mxu0 0.0
      %1145 = vmatmul.mubr.f32.gmra.mrb[0].mxu0 %v985
      %v1146 = vpop.f32.mrb[0].mxu0
      %v1147 = vadd.f32 0.0, %v1146
      %v1148 = vpop.f32.mrb[0].mxu0
      %v1149 = vadd.f32 0.0, %v1148
      %1150 = vmatprep.mubr.f32.mxu0 0.0
      %1151 = vmatmul.mubr.f32.gmra.mrb[0].mxu0 %v988
      %v1152 = vpop.f32.mrb[0].mxu0
      %v1153 = vadd.f32 0.0, %v1152
      %v1154 = vpop.f32.mrb[0].mxu0
      %v1155 = vadd.f32 0.0, %v1154
      %1156 = vmatprep.mubr.f32.mxu0 0.0
      %1157 = vmatmul.mubr.f32.gmra.mrb[0].mxu0 %v991
      %v1158 = vpop.f32.mrb[0].mxu0
      %v1159 = vadd.f32 0.0, %v1158
      %v1160 = vpop.f32.mrb[0].mxu0
      %v1161 = vadd.f32 0.0, %v1160
      %1162 = vmatprep.mubr.f32.mxu0 0.0
      %1163 = vmatmul.mubr.f32.gmra.mrb[0].mxu0 %v994
      %v1164 = vpop.f32.mrb[0].mxu0
      %v1165 = vadd.f32 0.0, %v1164
      %v1166 = vpop.f32.mrb[0].mxu0
      %v1167 = vadd.f32 0.0, %v1166
      %1168 = vmatprep.mubr.f32.mxu0 0.0
      %1169 = vmatmul.mubr.f32.gmra.mrb[0].mxu0 %v997
      %v1170 = vpop.f32.mrb[0].mxu0
      %v1171 = vadd.f32 0.0, %v1170
      %v1172 = vpop.f32.mrb[0].mxu0
      %v1173 = vadd.f32 0.0, %v1172
      %1174 = vmatprep.mubr.f32.mxu0 0.0
      %1175 = vmatmul.mubr.f32.gmra.mrb[0].mxu0 %v1000
      %v1176 = vpop.f32.mrb[0].mxu0
      %v1177 = vadd.f32 0.0, %v1176
      %v1178 = vpop.f32.mrb[0].mxu0
      %v1179 = vadd.f32 0.0, %v1178
      %1180 = vmatprep.mubr.f32.mxu0 0.0
      %1181 = vmatmul.mubr.f32.gmra.mrb[0].mxu0 %v1003
      %v1182 = vpop.f32.mrb[0].mxu0
      %v1183 = vadd.f32 0.0, %v1182
      %v1184 = vpop.f32.mrb[0].mxu0
      %v1185 = vadd.f32 0.0, %v1184
      %1186 = vmatprep.mubr.f32.mxu0 0.0
      %1187 = vmatmul.mubr.f32.gmra.mrb[0].mxu0 %v1006
      %v1188 = vpop.f32.mrb[0].mxu0
      %v1189 = vadd.f32 0.0, %v1188
      %v1190 = vpop.f32.mrb[0].mxu0
      %v1191 = vadd.f32 0.0, %v1190
      %1192 = vmatprep.mubr.f32.mxu0 0.0
      %1193 = vmatmul.mubr.f32.gmra.mrb[0].mxu0 %v1009
      %v1194 = vpop.f32.mrb[0].mxu0
      %v1195 = vadd.f32 0.0, %v1194
      %v1196 = vpop.f32.mrb[0].mxu0
      %v1197 = vadd.f32 0.0, %v1196
      %1198 = vmatprep.mubr.f32.mxu0 0.0
      %1199 = vmatmul.mubr.f32.gmra.mrb[0].mxu0 %v1012
      %v1200 = vpop.f32.mrb[0].mxu0
      %v1201 = vadd.f32 0.0, %v1200
      %v1202 = vpop.f32.mrb[0].mxu0
      %v1203 = vadd.f32 0.0, %v1202
      %1204 = vmatprep.mubr.f32.mxu0 0.0
      %1205 = vmatmul.mubr.f32.gmra.mrb[0].mxu0 %v1015
      %v1206 = vpop.f32.mrb[0].mxu0
      %v1207 = vadd.f32 0.0, %v1206
      %v1208 = vpop.f32.mrb[0].mxu0
      %v1209 = vadd.f32 0.0, %v1208
      %1210 = vmatprep.mubr.f32.mxu0 0.0
      %1211 = vmatmul.mubr.f32.gmra.mrb[0].mxu0 %v1018
      %v1212 = vpop.f32.mrb[0].mxu0
      %v1213 = vadd.f32 0.0, %v1212
      %v1214 = vpop.f32.mrb[0].mxu0
      %v1215 = vadd.f32 0.0, %v1214
      %1216 = vmatprep.mubr.f32.mxu0 0.0
      %1217 = vmatmul.mubr.f32.gmra.mrb[0].mxu0 %v1021
      %v1218 = vpop.f32.mrb[0].mxu0
      %v1219 = vadd.f32 0.0, %v1218
      %v1220 = vpop.f32.mrb[0].mxu0
      %v1221 = vadd.f32 0.0, %v1220
      %1222 = vmatprep.mubr.f32.mxu0 0.0
      %1223 = vmatmul.mubr.f32.gmra.mrb[0].mxu0 %v1024
      %v1224 = vpop.f32.mrb[0].mxu0
      %v1225 = vadd.f32 0.0, %v1224
      %v1226 = vpop.f32.mrb[0].mxu0
      %v1227 = vadd.f32 0.0, %v1226
      %1228 = vmatprep.mubr.f32.mxu0 0.0
      %1229 = vmatmul.mubr.f32.gmra.mrb[0].mxu0 %v1027
      %v1230 = vpop.f32.mrb[0].mxu0
      %v1231 = vadd.f32 0.0, %v1230
      %v1232 = vpop.f32.mrb[0].mxu0
      %v1233 = vadd.f32 0.0, %v1232
      %1234 = vmatprep.mubr.f32.mxu0 0.0
      %1235 = vmatmul.mubr.f32.gmra.mrb[0].mxu0 %v1030
      %v1236 = vpop.f32.mrb[0].mxu0
      %v1237 = vadd.f32 0.0, %v1236
      %v1238 = vpop.f32.mrb[0].mxu0
      %v1239 = vadd.f32 0.0, %v1238
      %1240 = vmatprep.mubr.f32.mxu0 0.0
      %1241 = vmatmul.mubr.f32.gmra.mrb[0].mxu0 %v1033
      %v1242 = vpop.f32.mrb[0].mxu0
      %v1243 = vadd.f32 0.0, %v1242
      %v1244 = vpop.f32.mrb[0].mxu0
      %v1245 = vadd.f32 0.0, %v1244
      %1246 = vmatprep.mubr.f32.mxu0 0.0
      %1247 = vmatmul.mubr.f32.gmra.mrb[0].mxu0 %v1036
      %v1248 = vpop.f32.mrb[0].mxu0
      %v1249 = vadd.f32 0.0, %v1248
      %v1250 = vpop.f32.mrb[0].mxu0
      %v1251 = vadd.f32 0.0, %v1250
      %1252 = vmatprep.mubr.f32.mxu0 0.0
      %1253 = vmatmul.mubr.f32.gmra.mrb[0].mxu0 %v1039
      %v1254 = vpop.f32.mrb[0].mxu0
      %v1255 = vadd.f32 0.0, %v1254
      %v1256 = vpop.f32.mrb[0].mxu0
      %v1257 = vadd.f32 0.0, %v1256
      %1258 = vmatprep.mubr.f32.mxu0 0.0
      %1259 = vmatmul.mubr.f32.gmra.mrb[0].mxu0 %v1042
      %v1260 = vpop.f32.mrb[0].mxu0
      %v1261 = vadd.f32 0.0, %v1260
      %v1262 = vpop.f32.mrb[0].mxu0
      %v1263 = vadd.f32 0.0, %v1262
      %1264 = vmatprep.mubr.f32.mxu0 0.0
      %1265 = vmatmul.mubr.f32.gmra.mrb[0].mxu0 %v1045
      %v1266 = vpop.f32.mrb[0].mxu0
      %v1267 = vadd.f32 0.0, %v1266
      %v1268 = vpop.f32.mrb[0].mxu0
      %v1269 = vadd.f32 0.0, %v1268
      %1270 = vmatprep.mubr.f32.mxu0 0.0
      %1271 = vmatmul.mubr.f32.gmra.mrb[0].mxu0 %v1048
      %v1272 = vpop.f32.mrb[0].mxu0
      %v1273 = vadd.f32 0.0, %v1272
      %v1274 = vpop.f32.mrb[0].mxu0
      %v1275 = vadd.f32 0.0, %v1274
      %1276 = vmatprep.mubr.f32.mxu0 0.0
      %1277 = vmatmul.mubr.f32.gmra.mrb[0].mxu0 %v1051
      %v1278 = vpop.f32.mrb[0].mxu0
      %v1279 = vadd.f32 0.0, %v1278
      %v1280 = vpop.f32.mrb[0].mxu0
      %v1281 = vadd.f32 0.0, %v1280
      %1282 = vmatprep.mubr.f32.mxu0 0.0
      %1283 = vmatmul.mubr.f32.gmra.mrb[0].mxu0 %v1054
      %v1284 = vpop.f32.mrb[0].mxu0
      %v1285 = vadd.f32 0.0, %v1284
      %v1286 = vpop.f32.mrb[0].mxu0
      %v1287 = vadd.f32 0.0, %v1286
      %1288 = vmatprep.mubr.f32.mxu0 0.0
      %1289 = vmatmul.mubr.f32.gmra.mrb[0].mxu0 %v1057
      %v1290 = vpop.f32.mrb[0].mxu0
      %v1291 = vadd.f32 0.0, %v1290
      %v1292 = vpop.f32.mrb[0].mxu0
      %v1293 = vadd.f32 0.0, %v1292
      %1294 = vmatprep.mubr.f32.mxu0 0.0
      %1295 = vmatmul.mubr.f32.gmra.mrb[0].mxu0 %v1060
      %v1296 = vpop.f32.mrb[0].mxu0
      %v1297 = vadd.f32 0.0, %v1296
      %v1298 = vpop.f32.mrb[0].mxu0
      %v1299 = vadd.f32 0.0, %v1298
      %1300 = vmatprep.mubr.f32.mxu0 0.0
      %1301 = vmatmul.mubr.f32.gmra.mrb[0].mxu0 %v1063
      %v1302 = vpop.f32.mrb[0].mxu0
      %v1303 = vadd.f32 0.0, %v1302
      %v1304 = vpop.f32.mrb[0].mxu0
      %v1305 = vadd.f32 0.0, %v1304
      %1306 = vmatprep.mubr.f32.mxu0 0.0
      %1307 = vmatmul.mubr.f32.gmra.mrb[0].mxu0 %v1066
      %v1308 = vpop.f32.mrb[0].mxu0
      %v1309 = vadd.f32 0.0, %v1308
      %v1310 = vpop.f32.mrb[0].mxu0
      %v1311 = vadd.f32 0.0, %v1310
      %1312 = vmatprep.mubr.f32.mxu0 0.0
      %1313 = vmatmul.mubr.f32.gmra.mrb[0].mxu0 %v1069
      %v1314 = vpop.f32.mrb[0].mxu0
      %v1315 = vadd.f32 0.0, %v1314
      %v1316 = vpop.f32.mrb[0].mxu0
      %v1317 = vadd.f32 0.0, %v1316
      %1318 = vmatprep.mubr.f32.mxu0 0.0
      %1319 = vmatmul.mubr.f32.gmra.mrb[0].mxu0 %v1072
      %v1320 = vpop.f32.mrb[0].mxu0
      %v1321 = vadd.f32 0.0, %v1320
      %v1322 = vpop.f32.mrb[0].mxu0
      %v1323 = vadd.f32 0.0, %v1322
      %1324 = vmatprep.mubr.f32.mxu0 0.0
      %1325 = vmatmul.mubr.f32.gmra.mrb[0].mxu0 %v1075
      %v1326 = vpop.f32.mrb[0].mxu0
      %v1327 = vadd.f32 0.0, %v1326
      %v1328 = vpop.f32.mrb[0].mxu0
      %v1329 = vadd.f32 0.0, %v1328
      %1330 = vmatprep.mubr.f32.mxu0 0.0
      %1331 = vmatmul.mubr.f32.gmra.mrb[0].mxu0 %v1078
      %v1332 = vpop.f32.mrb[0].mxu0
      %v1333 = vadd.f32 0.0, %v1332
      %v1334 = vpop.f32.mrb[0].mxu0
      %v1335 = vadd.f32 0.0, %v1334
      %1336 = vdwg.mxu0
      %1337 = vmatprep.subr.mxu0 %v971
      %1338 = vmatpush1.msra.mxu0 %v970
      %1339 = vmatprep.subr.mxu0 %v975
      %1340 = vmatpush1.msra.mxu0 %v974
      %1341 = vmatprep.subr.mxu0 %v979
      %1342 = vmatpush1.msra.mxu0 %v978
      %1343 = vmatprep.subr.mxu0 %v983
      %1344 = vmatpush1.msra.mxu0 %v982
      %1345 = vmatprep.subr.mxu0 0.0
      %1346 = vmatpush1.msra.mxu0 0.0
      %1347 = vmatprep.subr.mxu0 0.0
      %1348 = vmatpush1.msra.mxu0 0.0
      %1349 = vmatprep.subr.mxu0 0.0
      %1350 = vmatpush1.msra.mxu0 0.0
      %1351 = vmatprep.subr.mxu0 0.0
      %1352 = vmatpush1.msra.mxu0 0.0
      %1353 = vmatprep.subr.mxu0 0.0
      %1354 = vmatpush1.msra.mxu0 0.0
      %1355 = vmatprep.subr.mxu0 0.0
      %1356 = vmatpush1.msra.mxu0 0.0
      %1357 = vmatprep.subr.mxu0 0.0
      %1358 = vmatpush1.msra.mxu0 0.0
      %1359 = vmatprep.subr.mxu0 0.0
      %1360 = vmatpush1.msra.mxu0 0.0
      %1361 = vmatprep.subr.mxu0 0.0
      %1362 = vmatpush1.msra.mxu0 0.0
      %1363 = vmatprep.subr.mxu0 0.0
      %1364 = vmatpush1.msra.mxu0 0.0
      %1365 = vmatprep.subr.mxu0 0.0
      %1366 = vmatpush1.msra.mxu0 0.0
      %1367 = vmatprep.subr.mxu0 0.0
      %1368 = vmatpush1.msra.mxu0 0.0
      %1369 = vmatprep.subr.mxu0 0.0
      %1370 = vmatpush1.msra.mxu0 0.0
      %1371 = vmatprep.subr.mxu0 0.0
      %1372 = vmatpush1.msra.mxu0 0.0
      %1373 = vmatprep.subr.mxu0 0.0
      %1374 = vmatpush1.msra.mxu0 0.0
      %1375 = vmatprep.subr.mxu0 0.0
      %1376 = vmatpush1.msra.mxu0 0.0
      %1377 = vmatprep.subr.mxu0 0.0
      %1378 = vmatpush1.msra.mxu0 0.0
      %1379 = vmatprep.subr.mxu0 0.0
      %1380 = vmatpush1.msra.mxu0 0.0
      %1381 = vmatprep.subr.mxu0 0.0
      %1382 = vmatpush1.msra.mxu0 0.0
      %1383 = vmatprep.subr.mxu0 0.0
      %1384 = vmatpush1.msra.mxu0 0.0
      %1385 = vmatprep.subr.mxu0 0.0
      %1386 = vmatpush1.msra.mxu0 0.0
      %1387 = vmatprep.subr.mxu0 0.0
      %1388 = vmatpush1.msra.mxu0 0.0
      %1389 = vmatprep.subr.mxu0 0.0
      %1390 = vmatpush1.msra.mxu0 0.0
      %1391 = vmatprep.subr.mxu0 0.0
      %1392 = vmatpush1.msra.mxu0 0.0
      %1393 = vmatprep.subr.mxu0 0.0
      %1394 = vmatpush1.msra.mxu0 0.0
      %1395 = vmatprep.subr.mxu0 0.0
      %1396 = vmatpush1.msra.mxu0 0.0
      %1397 = vmatprep.subr.mxu0 0.0
      %1398 = vmatpush1.msra.mxu0 0.0
      %1399 = vmatprep.subr.mxu0 0.0
      %1400 = vmatpush1.msra.mxu0 0.0
      %1401 = vmatprep.mubr.f32.mxu0 0.0
      %1402 = vmatmul.mubr.f32.gmra.mrb[0].mxu0 %v985
      %v1403 = vpop.f32.mrb[0].mxu0
      %v1404 = vadd.f32 0.0, %v1403
      %v1405 = vpop.f32.mrb[0].mxu0
      %v1406 = vadd.f32 0.0, %v1405
      %1407 = vmatprep.mubr.f32.mxu0 0.0
      %1408 = vmatmul.mubr.f32.gmra.mrb[0].mxu0 %v988
      %v1409 = vpop.f32.mrb[0].mxu0
      %v1410 = vadd.f32 0.0, %v1409
      %v1411 = vpop.f32.mrb[0].mxu0
      %v1412 = vadd.f32 0.0, %v1411
      %1413 = vmatprep.mubr.f32.mxu0 0.0
      %1414 = vmatmul.mubr.f32.gmra.mrb[0].mxu0 %v991
      %v1415 = vpop.f32.mrb[0].mxu0
      %v1416 = vadd.f32 0.0, %v1415
      %v1417 = vpop.f32.mrb[0].mxu0
      %v1418 = vadd.f32 0.0, %v1417
      %1419 = vmatprep.mubr.f32.mxu0 0.0
      %1420 = vmatmul.mubr.f32.gmra.mrb[0].mxu0 %v994
      %v1421 = vpop.f32.mrb[0].mxu0
      %v1422 = vadd.f32 0.0, %v1421
      %v1423 = vpop.f32.mrb[0].mxu0
      %v1424 = vadd.f32 0.0, %v1423
      %1425 = vmatprep.mubr.f32.mxu0 0.0
      %1426 = vmatmul.mubr.f32.gmra.mrb[0].mxu0 %v997
      %v1427 = vpop.f32.mrb[0].mxu0
      %v1428 = vadd.f32 0.0, %v1427
      %v1429 = vpop.f32.mrb[0].mxu0
      %v1430 = vadd.f32 0.0, %v1429
      %1431 = vmatprep.mubr.f32.mxu0 0.0
      %1432 = vmatmul.mubr.f32.gmra.mrb[0].mxu0 %v1000
      %v1433 = vpop.f32.mrb[0].mxu0
      %v1434 = vadd.f32 0.0, %v1433
      %v1435 = vpop.f32.mrb[0].mxu0
      %v1436 = vadd.f32 0.0, %v1435
      %1437 = vmatprep.mubr.f32.mxu0 0.0
      %1438 = vmatmul.mubr.f32.gmra.mrb[0].mxu0 %v1003
      %v1439 = vpop.f32.mrb[0].mxu0
      %v1440 = vadd.f32 0.0, %v1439
      %v1441 = vpop.f32.mrb[0].mxu0
      %v1442 = vadd.f32 0.0, %v1441
      %1443 = vmatprep.mubr.f32.mxu0 0.0
      %1444 = vmatmul.mubr.f32.gmra.mrb[0].mxu0 %v1006
      %v1445 = vpop.f32.mrb[0].mxu0
      %v1446 = vadd.f32 0.0, %v1445
      %v1447 = vpop.f32.mrb[0].mxu0
      %v1448 = vadd.f32 0.0, %v1447
      %1449 = vmatprep.mubr.f32.mxu0 0.0
      %1450 = vmatmul.mubr.f32.gmra.mrb[0].mxu0 %v1009
      %v1451 = vpop.f32.mrb[0].mxu0
      %v1452 = vadd.f32 0.0, %v1451
      %v1453 = vpop.f32.mrb[0].mxu0
      %v1454 = vadd.f32 0.0, %v1453
      %1455 = vmatprep.mubr.f32.mxu0 0.0
      %1456 = vmatmul.mubr.f32.gmra.mrb[0].mxu0 %v1012
      %v1457 = vpop.f32.mrb[0].mxu0
      %v1458 = vadd.f32 0.0, %v1457
      %v1459 = vpop.f32.mrb[0].mxu0
      %v1460 = vadd.f32 0.0, %v1459
      %1461 = vmatprep.mubr.f32.mxu0 0.0
      %1462 = vmatmul.mubr.f32.gmra.mrb[0].mxu0 %v1015
      %v1463 = vpop.f32.mrb[0].mxu0
      %v1464 = vadd.f32 0.0, %v1463
      %v1465 = vpop.f32.mrb[0].mxu0
      %v1466 = vadd.f32 0.0, %v1465
      %1467 = vmatprep.mubr.f32.mxu0 0.0
      %1468 = vmatmul.mubr.f32.gmra.mrb[0].mxu0 %v1018
      %v1469 = vpop.f32.mrb[0].mxu0
      %v1470 = vadd.f32 0.0, %v1469
      %v1471 = vpop.f32.mrb[0].mxu0
      %v1472 = vadd.f32 0.0, %v1471
      %1473 = vmatprep.mubr.f32.mxu0 0.0
      %1474 = vmatmul.mubr.f32.gmra.mrb[0].mxu0 %v1021
      %v1475 = vpop.f32.mrb[0].mxu0
      %v1476 = vadd.f32 0.0, %v1475
      %v1477 = vpop.f32.mrb[0].mxu0
      %v1478 = vadd.f32 0.0, %v1477
      %1479 = vmatprep.mubr.f32.mxu0 0.0
      %1480 = vmatmul.mubr.f32.gmra.mrb[0].mxu0 %v1024
      %v1481 = vpop.f32.mrb[0].mxu0
      %v1482 = vadd.f32 0.0, %v1481
      %v1483 = vpop.f32.mrb[0].mxu0
      %v1484 = vadd.f32 0.0, %v1483
      %1485 = vmatprep.mubr.f32.mxu0 0.0
      %1486 = vmatmul.mubr.f32.gmra.mrb[0].mxu0 %v1027
      %v1487 = vpop.f32.mrb[0].mxu0
      %v1488 = vadd.f32 0.0, %v1487
      %v1489 = vpop.f32.mrb[0].mxu0
      %v1490 = vadd.f32 0.0, %v1489
      %1491 = vmatprep.mubr.f32.mxu0 0.0
      %1492 = vmatmul.mubr.f32.gmra.mrb[0].mxu0 %v1030
      %v1493 = vpop.f32.mrb[0].mxu0
      %v1494 = vadd.f32 0.0, %v1493
      %v1495 = vpop.f32.mrb[0].mxu0
      %v1496 = vadd.f32 0.0, %v1495
      %1497 = vmatprep.mubr.f32.mxu0 0.0
      %1498 = vmatmul.mubr.f32.gmra.mrb[0].mxu0 %v1033
      %v1499 = vpop.f32.mrb[0].mxu0
      %v1500 = vadd.f32 0.0, %v1499
      %v1501 = vpop.f32.mrb[0].mxu0
      %v1502 = vadd.f32 0.0, %v1501
      %1503 = vmatprep.mubr.f32.mxu0 0.0
      %1504 = vmatmul.mubr.f32.gmra.mrb[0].mxu0 %v1036
      %v1505 = vpop.f32.mrb[0].mxu0
      %v1506 = vadd.f32 0.0, %v1505
      %v1507 = vpop.f32.mrb[0].mxu0
      %v1508 = vadd.f32 0.0, %v1507
      %1509 = vmatprep.mubr.f32.mxu0 0.0
      %1510 = vmatmul.mubr.f32.gmra.mrb[0].mxu0 %v1039
      %v1511 = vpop.f32.mrb[0].mxu0
      %v1512 = vadd.f32 0.0, %v1511
      %v1513 = vpop.f32.mrb[0].mxu0
      %v1514 = vadd.f32 0.0, %v1513
      %1515 = vmatprep.mubr.f32.mxu0 0.0
      %1516 = vmatmul.mubr.f32.gmra.mrb[0].mxu0 %v1042
      %v1517 = vpop.f32.mrb[0].mxu0
      %v1518 = vadd.f32 0.0, %v1517
      %v1519 = vpop.f32.mrb[0].mxu0
      %v1520 = vadd.f32 0.0, %v1519
      %1521 = vmatprep.mubr.f32.mxu0 0.0
      %1522 = vmatmul.mubr.f32.gmra.mrb[0].mxu0 %v1045
      %v1523 = vpop.f32.mrb[0].mxu0
      %v1524 = vadd.f32 0.0, %v1523
      %v1525 = vpop.f32.mrb[0].mxu0
      %v1526 = vadd.f32 0.0, %v1525
      %1527 = vmatprep.mubr.f32.mxu0 0.0
      %1528 = vmatmul.mubr.f32.gmra.mrb[0].mxu0 %v1048
      %v1529 = vpop.f32.mrb[0].mxu0
      %v1530 = vadd.f32 0.0, %v1529
      %v1531 = vpop.f32.mrb[0].mxu0
      %v1532 = vadd.f32 0.0, %v1531
      %1533 = vmatprep.mubr.f32.mxu0 0.0
      %1534 = vmatmul.mubr.f32.gmra.mrb[0].mxu0 %v1051
      %v1535 = vpop.f32.mrb[0].mxu0
      %v1536 = vadd.f32 0.0, %v1535
      %v1537 = vpop.f32.mrb[0].mxu0
      %v1538 = vadd.f32 0.0, %v1537
      %1539 = vmatprep.mubr.f32.mxu0 0.0
      %1540 = vmatmul.mubr.f32.gmra.mrb[0].mxu0 %v1054
      %v1541 = vpop.f32.mrb[0].mxu0
      %v1542 = vadd.f32 0.0, %v1541
      %v1543 = vpop.f32.mrb[0].mxu0
      %v1544 = vadd.f32 0.0, %v1543
      %1545 = vmatprep.mubr.f32.mxu0 0.0
      %1546 = vmatmul.mubr.f32.gmra.mrb[0].mxu0 %v1057
      %v1547 = vpop.f32.mrb[0].mxu0
      %v1548 = vadd.f32 0.0, %v1547
      %v1549 = vpop.f32.mrb[0].mxu0
      %v1550 = vadd.f32 0.0, %v1549
      %1551 = vmatprep.mubr.f32.mxu0 0.0
      %1552 = vmatmul.mubr.f32.gmra.mrb[0].mxu0 %v1060
      %v1553 = vpop.f32.mrb[0].mxu0
      %v1554 = vadd.f32 0.0, %v1553
      %v1555 = vpop.f32.mrb[0].mxu0
      %v1556 = vadd.f32 0.0, %v1555
      %1557 = vmatprep.mubr.f32.mxu0 0.0
      %1558 = vmatmul.mubr.f32.gmra.mrb[0].mxu0 %v1063
      %v1559 = vpop.f32.mrb[0].mxu0
      %v1560 = vadd.f32 0.0, %v1559
      %v1561 = vpop.f32.mrb[0].mxu0
      %v1562 = vadd.f32 0.0, %v1561
      %1563 = vmatprep.mubr.f32.mxu0 0.0
      %1564 = vmatmul.mubr.f32.gmra.mrb[0].mxu0 %v1066
      %v1565 = vpop.f32.mrb[0].mxu0
      %v1566 = vadd.f32 0.0, %v1565
      %v1567 = vpop.f32.mrb[0].mxu0
      %v1568 = vadd.f32 0.0, %v1567
      %1569 = vmatprep.mubr.f32.mxu0 0.0
      %1570 = vmatmul.mubr.f32.gmra.mrb[0].mxu0 %v1069
      %v1571 = vpop.f32.mrb[0].mxu0
      %v1572 = vadd.f32 0.0, %v1571
      %v1573 = vpop.f32.mrb[0].mxu0
      %v1574 = vadd.f32 0.0, %v1573
      %1575 = vmatprep.mubr.f32.mxu0 0.0
      %1576 = vmatmul.mubr.f32.gmra.mrb[0].mxu0 %v1072
      %v1577 = vpop.f32.mrb[0].mxu0
      %v1578 = vadd.f32 0.0, %v1577
      %v1579 = vpop.f32.mrb[0].mxu0
      %v1580 = vadd.f32 0.0, %v1579
      %1581 = vmatprep.mubr.f32.mxu0 0.0
      %1582 = vmatmul.mubr.f32.gmra.mrb[0].mxu0 %v1075
      %v1583 = vpop.f32.mrb[0].mxu0
      %v1584 = vadd.f32 0.0, %v1583
      %v1585 = vpop.f32.mrb[0].mxu0
      %v1586 = vadd.f32 0.0, %v1585
      %1587 = vmatprep.mubr.f32.mxu0 0.0
      %1588 = vmatmul.mubr.f32.gmra.mrb[0].mxu0 %v1078
      %v1589 = vpop.f32.mrb[0].mxu0
      %v1590 = vadd.f32 0.0, %v1589
      %v1591 = vpop.f32.mrb[0].mxu0
      %v1592 = vadd.f32 0.0, %v1591
      %1593 = vdwg.mxu0
      %v1594 = vmul.f32 %v521, %v1147
      %v1595 = vmul.f32 %v523, %v1149
      %v1596 = vmul.f32 %v778, %v1404
      %v1597 = vmul.f32 %v780, %v1406
      %v1598 = vmul.f32 %v527, %v1153
      %v1599 = vmul.f32 %v529, %v1155
      %v1600 = vmul.f32 %v784, %v1410
      %v1601 = vmul.f32 %v786, %v1412
      %v1602 = vmul.f32 %v533, %v1159
      %v1603 = vmul.f32 %v535, %v1161
      %v1604 = vmul.f32 %v790, %v1416
      %v1605 = vmul.f32 %v792, %v1418
      %v1606 = vmul.f32 %v539, %v1165
      %v1607 = vmul.f32 %v541, %v1167
      %v1608 = vmul.f32 %v796, %v1422
      %v1609 = vmul.f32 %v798, %v1424
      %v1610 = vmul.f32 %v545, %v1171
      %v1611 = vmul.f32 %v547, %v1173
      %v1612 = vmul.f32 %v802, %v1428
      %v1613 = vmul.f32 %v804, %v1430
      %v1614 = vmul.f32 %v551, %v1177
      %v1615 = vmul.f32 %v553, %v1179
      %v1616 = vmul.f32 %v808, %v1434
      %v1617 = vmul.f32 %v810, %v1436
      %v1618 = vmul.f32 %v557, %v1183
      %v1619 = vmul.f32 %v559, %v1185
      %v1620 = vmul.f32 %v814, %v1440
      %v1621 = vmul.f32 %v816, %v1442
      %v1622 = vmul.f32 %v563, %v1189
      %v1623 = vmul.f32 %v565, %v1191
      %v1624 = vmul.f32 %v820, %v1446
      %v1625 = vmul.f32 %v822, %v1448
      %v1626 = vmul.f32 %v569, %v1195
      %v1627 = vmul.f32 %v571, %v1197
      %v1628 = vmul.f32 %v826, %v1452
      %v1629 = vmul.f32 %v828, %v1454
      %v1630 = vmul.f32 %v575, %v1201
      %v1631 = vmul.f32 %v577, %v1203
      %v1632 = vmul.f32 %v832, %v1458
      %v1633 = vmul.f32 %v834, %v1460
      %v1634 = vmul.f32 %v581, %v1207
      %v1635 = vmul.f32 %v583, %v1209
      %v1636 = vmul.f32 %v838, %v1464
      %v1637 = vmul.f32 %v840, %v1466
      %v1638 = vmul.f32 %v587, %v1213
      %v1639 = vmul.f32 %v589, %v1215
      %v1640 = vmul.f32 %v844, %v1470
      %v1641 = vmul.f32 %v846, %v1472
      %v1642 = vmul.f32 %v593, %v1219
      %v1643 = vmul.f32 %v595, %v1221
      %v1644 = vmul.f32 %v850, %v1476
      %v1645 = vmul.f32 %v852, %v1478
      %v1646 = vmul.f32 %v599, %v1225
      %v1647 = vmul.f32 %v601, %v1227
      %v1648 = vmul.f32 %v856, %v1482
      %v1649 = vmul.f32 %v858, %v1484
      %v1650 = vmul.f32 %v605, %v1231
      %v1651 = vmul.f32 %v607, %v1233
      %v1652 = vmul.f32 %v862, %v1488
      %v1653 = vmul.f32 %v864, %v1490
      %v1654 = vmul.f32 %v611, %v1237
      %v1655 = vmul.f32 %v613, %v1239
      %v1656 = vmul.f32 %v868, %v1494
      %v1657 = vmul.f32 %v870, %v1496
      %v1658 = vmul.f32 %v617, %v1243
      %v1659 = vmul.f32 %v619, %v1245
      %v1660 = vmul.f32 %v874, %v1500
      %v1661 = vmul.f32 %v876, %v1502
      %v1662 = vmul.f32 %v623, %v1249
      %v1663 = vmul.f32 %v625, %v1251
      %v1664 = vmul.f32 %v880, %v1506
      %v1665 = vmul.f32 %v882, %v1508
      %v1666 = vmul.f32 %v629, %v1255
      %v1667 = vmul.f32 %v631, %v1257
      %v1668 = vmul.f32 %v886, %v1512
      %v1669 = vmul.f32 %v888, %v1514
      %v1670 = vmul.f32 %v635, %v1261
      %v1671 = vmul.f32 %v637, %v1263
      %v1672 = vmul.f32 %v892, %v1518
      %v1673 = vmul.f32 %v894, %v1520
      %v1674 = vmul.f32 %v641, %v1267
      %v1675 = vmul.f32 %v643, %v1269
      %v1676 = vmul.f32 %v898, %v1524
      %v1677 = vmul.f32 %v900, %v1526
      %v1678 = vmul.f32 %v647, %v1273
      %v1679 = vmul.f32 %v649, %v1275
      %v1680 = vmul.f32 %v904, %v1530
      %v1681 = vmul.f32 %v906, %v1532
      %v1682 = vmul.f32 %v653, %v1279
      %v1683 = vmul.f32 %v655, %v1281
      %v1684 = vmul.f32 %v910, %v1536
      %v1685 = vmul.f32 %v912, %v1538
      %v1686 = vmul.f32 %v659, %v1285
      %v1687 = vmul.f32 %v661, %v1287
      %v1688 = vmul.f32 %v916, %v1542
      %v1689 = vmul.f32 %v918, %v1544
      %v1690 = vmul.f32 %v665, %v1291
      %v1691 = vmul.f32 %v667, %v1293
      %v1692 = vmul.f32 %v922, %v1548
      %v1693 = vmul.f32 %v924, %v1550
      %v1694 = vmul.f32 %v671, %v1297
      %v1695 = vmul.f32 %v673, %v1299
      %v1696 = vmul.f32 %v928, %v1554
      %v1697 = vmul.f32 %v930, %v1556
      %v1698 = vmul.f32 %v677, %v1303
      %v1699 = vmul.f32 %v679, %v1305
      %v1700 = vmul.f32 %v934, %v1560
      %v1701 = vmul.f32 %v936, %v1562
      %v1702 = vmul.f32 %v683, %v1309
      %v1703 = vmul.f32 %v685, %v1311
      %v1704 = vmul.f32 %v940, %v1566
      %v1705 = vmul.f32 %v942, %v1568
      %v1706 = vmul.f32 %v689, %v1315
      %v1707 = vmul.f32 %v691, %v1317
      %v1708 = vmul.f32 %v946, %v1572
      %v1709 = vmul.f32 %v948, %v1574
      %v1710 = vmul.f32 %v695, %v1321
      %v1711 = vmul.f32 %v697, %v1323
      %v1712 = vmul.f32 %v952, %v1578
      %v1713 = vmul.f32 %v954, %v1580
      %v1714 = vmul.f32 %v701, %v1327
      %v1715 = vmul.f32 %v703, %v1329
      %v1716 = vmul.f32 %v958, %v1584
      %v1717 = vmul.f32 %v960, %v1586
      %v1718 = vmul.f32 %v707, %v1333
      %v1719 = vmul.f32 %v709, %v1335
      %v1720 = vmul.f32 %v964, %v1590
      %v1721 = vmul.f32 %v966, %v1592
      %1722 = vrot.lane.b32.xlu0 %v309, 32
      %v1723 = vpop.permute.xlu0 %1722
      %1724 = vrot.lane.b32.xlu0 %v310, 32
      %v1725 = vpop.permute.xlu0 %1724
      %1726 = vrot.lane.b32.xlu0 %v311, 32
      %v1727 = vpop.permute.xlu0 %1726
      %1728 = vrot.lane.b32.xlu0 %v312, 32
      %v1729 = vpop.permute.xlu0 %1728
      %1730 = vrot.lane.b32.xlu0 %v313, 32
      %v1731 = vpop.permute.xlu0 %1730
      %1732 = vrot.lane.b32.xlu0 %v314, 32
      %v1733 = vpop.permute.xlu0 %1732
      %1734 = vrot.lane.b32.xlu0 %v315, 32
      %v1735 = vpop.permute.xlu0 %1734
      %1736 = vrot.lane.b32.xlu0 %v316, 32
      %v1737 = vpop.permute.xlu0 %1736
      %1738 = vrot.lane.b32.xlu0 %v317, 32
      %v1739 = vpop.permute.xlu0 %1738
      %1740 = vrot.lane.b32.xlu0 %v318, 32
      %v1741 = vpop.permute.xlu0 %1740
      %1742 = vrot.lane.b32.xlu0 %v319, 32
      %v1743 = vpop.permute.xlu0 %1742
      %1744 = vrot.lane.b32.xlu0 %v320, 32
      %v1745 = vpop.permute.xlu0 %1744
      %1746 = vrot.lane.b32.xlu0 %v321, 32
      %v1747 = vpop.permute.xlu0 %1746
      %1748 = vrot.lane.b32.xlu0 %v322, 32
      %v1749 = vpop.permute.xlu0 %1748
      %1750 = vrot.lane.b32.xlu0 %v323, 32
      %v1751 = vpop.permute.xlu0 %1750
      %1752 = vrot.lane.b32.xlu0 %v324, 32
      %v1753 = vpop.permute.xlu0 %1752
      %1754 = vrot.lane.b32.xlu0 %v325, 32
      %v1755 = vpop.permute.xlu0 %1754
      %1756 = vrot.lane.b32.xlu0 %v326, 32
      %v1757 = vpop.permute.xlu0 %1756
      %1758 = vrot.lane.b32.xlu0 %v327, 32
      %v1759 = vpop.permute.xlu0 %1758
      %1760 = vrot.lane.b32.xlu0 %v328, 32
      %v1761 = vpop.permute.xlu0 %1760
      %1762 = vrot.lane.b32.xlu0 %v329, 32
      %v1763 = vpop.permute.xlu0 %1762
      %1764 = vrot.lane.b32.xlu0 %v330, 32
      %v1765 = vpop.permute.xlu0 %1764
      %1766 = vrot.lane.b32.xlu0 %v331, 32
      %v1767 = vpop.permute.xlu0 %1766
      %1768 = vrot.lane.b32.xlu0 %v332, 32
      %v1769 = vpop.permute.xlu0 %1768
      %1770 = vrot.lane.b32.xlu0 %v333, 32
      %v1771 = vpop.permute.xlu0 %1770
      %1772 = vrot.lane.b32.xlu0 %v334, 32
      %v1773 = vpop.permute.xlu0 %1772
      %1774 = vrot.lane.b32.xlu0 %v335, 32
      %v1775 = vpop.permute.xlu0 %1774
      %1776 = vrot.lane.b32.xlu0 %v336, 32
      %v1777 = vpop.permute.xlu0 %1776
      %1778 = vrot.lane.b32.xlu0 %v337, 32
      %v1779 = vpop.permute.xlu0 %1778
      %1780 = vrot.lane.b32.xlu0 %v338, 32
      %v1781 = vpop.permute.xlu0 %1780
      %1782 = vrot.lane.b32.xlu0 %v339, 32
      %v1783 = vpop.permute.xlu0 %1782
      %1784 = vrot.lane.b32.xlu0 %v340, 32
      %v1785 = vpop.permute.xlu0 %1784
      %v1818 = vsel %vm357, %v277, %v1723
      %v1819 = vsel %vm357, %v278, %v1725
      %v1820 = vsel %vm357, %v279, %v1727
      %v1821 = vsel %vm357, %v280, %v1729
      %v1822 = vsel %vm357, %v281, %v1731
      %v1823 = vsel %vm357, %v282, %v1733
      %v1824 = vsel %vm357, %v283, %v1735
      %v1825 = vsel %vm357, %v284, %v1737
      %v1826 = vsel %vm357, %v285, %v1739
      %v1827 = vsel %vm357, %v286, %v1741
      %v1828 = vsel %vm357, %v287, %v1743
      %v1829 = vsel %vm357, %v288, %v1745
      %v1830 = vsel %vm357, %v289, %v1747
      %v1831 = vsel %vm357, %v290, %v1749
      %v1832 = vsel %vm357, %v291, %v1751
      %v1833 = vsel %vm357, %v292, %v1753
      %v1834 = vsel %vm357, %v293, %v1755
      %v1835 = vsel %vm357, %v294, %v1757
      %v1836 = vsel %vm357, %v295, %v1759
      %v1837 = vsel %vm357, %v296, %v1761
      %v1838 = vsel %vm357, %v297, %v1763
      %v1839 = vsel %vm357, %v298, %v1765
      %v1840 = vsel %vm357, %v299, %v1767
      %v1841 = vsel %vm357, %v300, %v1769
      %v1842 = vsel %vm357, %v301, %v1771
      %v1843 = vsel %vm357, %v302, %v1773
      %v1844 = vsel %vm357, %v303, %v1775
      %v1845 = vsel %vm357, %v304, %v1777
      %v1846 = vsel %vm357, %v305, %v1779
      %v1847 = vsel %vm357, %v306, %v1781
      %v1848 = vsel %vm357, %v307, %v1783
      %v1849 = vsel %vm357, %v308, %v1785
      %v1850 = vld [vmem:[%s4] sm:$0xff]
      %v1851 = vld [vmem:[%s4 + $0x8] sm:$0xff]
      %v1852 = vld [vmem:[%s4 + $0x10] sm:$0xff]
      %v1853 = vld [vmem:[%s4 + $0x18] sm:$0xff]
      %v1854 = vld [vmem:[%s4 + $0x20] sm:$0xff]
      %v1855 = vld [vmem:[%s4 + $0x28] sm:$0xff]
      %v1856 = vld [vmem:[%s4 + $0x30] sm:$0xff]
      %v1857 = vld [vmem:[%s4 + $0x38] sm:$0xff]
      %v1858 = vld [vmem:[%s4 + $0x40] sm:$0xff]
      %v1859 = vld [vmem:[%s4 + $0x48] sm:$0xff]
      %v1860 = vld [vmem:[%s4 + $0x50] sm:$0xff]
      %v1861 = vld [vmem:[%s4 + $0x58] sm:$0xff]
      %v1862 = vld [vmem:[%s4 + $0x60] sm:$0xff]
      %v1863 = vld [vmem:[%s4 + $0x68] sm:$0xff]
      %v1864 = vld [vmem:[%s4 + $0x70] sm:$0xff]
      %v1865 = vld [vmem:[%s4 + $0x78] sm:$0xff]
      %v1866 = vld [vmem:[%s4 + $0x80] sm:$0xff]
      %v1867 = vld [vmem:[%s4 + $0x88] sm:$0xff]
      %v1868 = vld [vmem:[%s4 + $0x90] sm:$0xff]
      %v1869 = vld [vmem:[%s4 + $0x98] sm:$0xff]
      %v1870 = vld [vmem:[%s4 + $0xa0] sm:$0xff]
      %v1871 = vld [vmem:[%s4 + $0xa8] sm:$0xff]
      %v1872 = vld [vmem:[%s4 + $0xb0] sm:$0xff]
      %v1873 = vld [vmem:[%s4 + $0xb8] sm:$0xff]
      %v1874 = vld [vmem:[%s4 + $0xc0] sm:$0xff]
      %v1875 = vld [vmem:[%s4 + $0xc8] sm:$0xff]
      %v1876 = vld [vmem:[%s4 + $0xd0] sm:$0xff]
      %v1877 = vld [vmem:[%s4 + $0xd8] sm:$0xff]
      %v1878 = vld [vmem:[%s4 + $0xe0] sm:$0xff]
      %v1879 = vld [vmem:[%s4 + $0xe8] sm:$0xff]
      %v1880 = vld [vmem:[%s4 + $0xf0] sm:$0xff]
      %v1881 = vld [vmem:[%s4 + $0xf8] sm:$0xff]
      %v1882 = vld [vmem:[%s4 + $0x100] sm:$0xff]
      %v1883 = vld [vmem:[%s4 + $0x108] sm:$0xff]
      %v1884 = vld [vmem:[%s4 + $0x110] sm:$0xff]
      %v1885 = vld [vmem:[%s4 + $0x118] sm:$0xff]
      %v1886 = vld [vmem:[%s4 + $0x120] sm:$0xff]
      %v1887 = vld [vmem:[%s4 + $0x128] sm:$0xff]
      %v1888 = vld [vmem:[%s4 + $0x130] sm:$0xff]
      %v1889 = vld [vmem:[%s4 + $0x138] sm:$0xff]
      %v1890 = vld [vmem:[%s4 + $0x140] sm:$0xff]
      %v1891 = vld [vmem:[%s4 + $0x148] sm:$0xff]
      %v1892 = vld [vmem:[%s4 + $0x150] sm:$0xff]
      %v1893 = vld [vmem:[%s4 + $0x158] sm:$0xff]
      %v1894 = vld [vmem:[%s4 + $0x160] sm:$0xff]
      %v1895 = vld [vmem:[%s4 + $0x168] sm:$0xff]
      %v1896 = vld [vmem:[%s4 + $0x170] sm:$0xff]
      %v1897 = vld [vmem:[%s4 + $0x178] sm:$0xff]
      %v1898 = vld [vmem:[%s4 + $0x180] sm:$0xff]
      %v1899 = vld [vmem:[%s4 + $0x188] sm:$0xff]
      %v1900 = vld [vmem:[%s4 + $0x190] sm:$0xff]
      %v1901 = vld [vmem:[%s4 + $0x198] sm:$0xff]
      %v1902 = vld [vmem:[%s4 + $0x1a0] sm:$0xff]
      %v1903 = vld [vmem:[%s4 + $0x1a8] sm:$0xff]
      %v1904 = vld [vmem:[%s4 + $0x1b0] sm:$0xff]
      %v1905 = vld [vmem:[%s4 + $0x1b8] sm:$0xff]
      %v1906 = vld [vmem:[%s4 + $0x1c0] sm:$0xff]
      %v1907 = vld [vmem:[%s4 + $0x1c8] sm:$0xff]
      %v1908 = vld [vmem:[%s4 + $0x1d0] sm:$0xff]
      %v1909 = vld [vmem:[%s4 + $0x1d8] sm:$0xff]
      %v1910 = vld [vmem:[%s4 + $0x1e0] sm:$0xff]
      %v1911 = vld [vmem:[%s4 + $0x1e8] sm:$0xff]
      %v1912 = vld [vmem:[%s4 + $0x1f0] sm:$0xff]
      %v1913 = vld [vmem:[%s4 + $0x1f8] sm:$0xff]
      %v1914 = vld [vmem:[%s4 + $0x200] sm:$0xff]
      %v1915 = vld [vmem:[%s4 + $0x208] sm:$0xff]
      %v1916 = vld [vmem:[%s4 + $0x210] sm:$0xff]
      %v1917 = vld [vmem:[%s4 + $0x218] sm:$0xff]
      %v1918 = vld [vmem:[%s4 + $0x220] sm:$0xff]
      %v1919 = vld [vmem:[%s4 + $0x228] sm:$0xff]
      %v1920 = vld [vmem:[%s4 + $0x230] sm:$0xff]
      %v1921 = vld [vmem:[%s4 + $0x238] sm:$0xff]
      %v1922 = vld [vmem:[%s5] sm:$0x1]
      %v1924 = vlaneseq
      %v1925 = vshrl.u32 %v1924, 7
      %v1926 = vsub.s32 0, %v1925
      %v1927 = vrot.slane %v1922, %v1926
      %vm1929 = vcmask 523264
      %v1931 = vsel %vm1929, %v1818, 0
      %v1934 = vsel %vm1929, %v1819, 0
      %v1937 = vsel %vm1929, %v1820, 0
      %v1940 = vsel %vm1929, %v1821, 0
      %v1943 = vsel %vm1929, %v1822, 0
      %v1946 = vsel %vm1929, %v1823, 0
      %v1949 = vsel %vm1929, %v1824, 0
      %v1952 = vsel %vm1929, %v1825, 0
      %v1955 = vsel %vm1929, %v1826, 0
      %v1958 = vsel %vm1929, %v1827, 0
      %v1961 = vsel %vm1929, %v1828, 0
      %v1964 = vsel %vm1929, %v1829, 0
      %v1967 = vsel %vm1929, %v1830, 0
      %v1970 = vsel %vm1929, %v1831, 0
      %v1973 = vsel %vm1929, %v1832, 0
      %v1976 = vsel %vm1929, %v1833, 0
      %v1979 = vsel %vm1929, %v1834, 0
      %v1982 = vsel %vm1929, %v1835, 0
      %v1985 = vsel %vm1929, %v1836, 0
      %v1988 = vsel %vm1929, %v1837, 0
      %v1991 = vsel %vm1929, %v1838, 0
      %v1994 = vsel %vm1929, %v1839, 0
      %v1997 = vsel %vm1929, %v1840, 0
      %v2000 = vsel %vm1929, %v1841, 0
      %v2003 = vsel %vm1929, %v1842, 0
      %v2006 = vsel %vm1929, %v1843, 0
      %v2009 = vsel %vm1929, %v1844, 0
      %v2012 = vsel %vm1929, %v1845, 0
      %v2015 = vsel %vm1929, %v1846, 0
      %v2018 = vsel %vm1929, %v1847, 0
      %v2021 = vsel %vm1929, %v1848, 0
      %v2024 = vsel %vm1929, %v1849, 0
      %2026 = vmatprep.subr.mxu0 0.0
      %2027 = vmatpush1.msra.mxu0 %v1850
      %2028 = vmatprep.subr.mxu0 0.0
      %2029 = vmatpush1.msra.mxu0 %v1851
      %2030 = vmatprep.subr.mxu0 0.0
      %2031 = vmatpush1.msra.mxu0 %v1852
      %2032 = vmatprep.subr.mxu0 0.0
      %2033 = vmatpush1.msra.mxu0 %v1853
      %2034 = vmatprep.subr.mxu0 0.0
      %2035 = vmatpush1.msra.mxu0 %v1854
      %2036 = vmatprep.subr.mxu0 0.0
      %2037 = vmatpush1.msra.mxu0 %v1855
      %2038 = vmatprep.subr.mxu0 0.0
      %2039 = vmatpush1.msra.mxu0 %v1856
      %2040 = vmatprep.subr.mxu0 0.0
      %2041 = vmatpush1.msra.mxu0 %v1857
      %2042 = vmatprep.subr.mxu0 0.0
      %2043 = vmatpush1.msra.mxu0 %v1858
      %2044 = vmatprep.subr.mxu0 0.0
      %2045 = vmatpush1.msra.mxu0 %v1859
      %2046 = vmatprep.subr.mxu0 0.0
      %2047 = vmatpush1.msra.mxu0 %v1860
      %2048 = vmatprep.subr.mxu0 0.0
      %2049 = vmatpush1.msra.mxu0 %v1861
      %2050 = vmatprep.subr.mxu0 0.0
      %2051 = vmatpush1.msra.mxu0 %v1862
      %2052 = vmatprep.subr.mxu0 0.0
      %2053 = vmatpush1.msra.mxu0 %v1863
      %2054 = vmatprep.subr.mxu0 0.0
      %2055 = vmatpush1.msra.mxu0 %v1864
      %2056 = vmatprep.subr.mxu0 0.0
      %2057 = vmatpush1.msra.mxu0 %v1865
      %2058 = vmatprep.subr.mxu0 0.0
      %2059 = vmatpush1.msra.mxu0 %v1866
      %2060 = vmatprep.subr.mxu0 0.0
      %2061 = vmatpush1.msra.mxu0 %v1867
      %2062 = vmatprep.subr.mxu0 0.0
      %2063 = vmatpush1.msra.mxu0 %v1868
      %2064 = vmatprep.subr.mxu0 0.0
      %2065 = vmatpush1.msra.mxu0 %v1869
      %2066 = vmatprep.subr.mxu0 0.0
      %2067 = vmatpush1.msra.mxu0 %v1870
      %2068 = vmatprep.subr.mxu0 0.0
      %2069 = vmatpush1.msra.mxu0 %v1871
      %2070 = vmatprep.subr.mxu0 0.0
      %2071 = vmatpush1.msra.mxu0 %v1872
      %2072 = vmatprep.subr.mxu0 0.0
      %2073 = vmatpush1.msra.mxu0 %v1873
      %2074 = vmatprep.subr.mxu0 0.0
      %2075 = vmatpush1.msra.mxu0 %v1874
      %2076 = vmatprep.subr.mxu0 0.0
      %2077 = vmatpush1.msra.mxu0 %v1875
      %2078 = vmatprep.subr.mxu0 0.0
      %2079 = vmatpush1.msra.mxu0 %v1876
      %2080 = vmatprep.subr.mxu0 0.0
      %2081 = vmatpush1.msra.mxu0 %v1877
      %2082 = vmatprep.subr.mxu0 0.0
      %2083 = vmatpush1.msra.mxu0 %v1878
      %2084 = vmatprep.subr.mxu0 0.0
      %2085 = vmatpush1.msra.mxu0 %v1879
      %2086 = vmatprep.subr.mxu0 0.0
      %2087 = vmatpush1.msra.mxu0 %v1880
      %2088 = vmatprep.subr.mxu0 0.0
      %2089 = vmatpush1.msra.mxu0 %v1881
      %2090 = vmatprep.mubr.f32.mxu0 %v1595
      %2091 = vmatmul.mubr.f32.gmra.mrb[0].mxu0 %v1594
      %v2092 = vpop.f32.mrb[0].mxu0
      %v2093 = vadd.f32 %v1927, %v2092
      %v2094 = vpop.f32.mrb[0].mxu0
      %2095 = vmatprep.mubr.f32.mxu0 %v1599
      %2096 = vmatmul.mubr.f32.gmra.mrb[0].mxu0 %v1598
      %v2097 = vpop.f32.mrb[0].mxu0
      %v2098 = vadd.f32 %v1927, %v2097
      %v2099 = vpop.f32.mrb[0].mxu0
      %2100 = vmatprep.mubr.f32.mxu0 %v1603
      %2101 = vmatmul.mubr.f32.gmra.mrb[0].mxu0 %v1602
      %v2102 = vpop.f32.mrb[0].mxu0
      %v2103 = vadd.f32 %v1927, %v2102
      %v2104 = vpop.f32.mrb[0].mxu0
      %2105 = vmatprep.mubr.f32.mxu0 %v1607
      %2106 = vmatmul.mubr.f32.gmra.mrb[0].mxu0 %v1606
      %v2107 = vpop.f32.mrb[0].mxu0
      %v2108 = vadd.f32 %v1927, %v2107
      %v2109 = vpop.f32.mrb[0].mxu0
      %2110 = vmatprep.mubr.f32.mxu0 %v1611
      %2111 = vmatmul.mubr.f32.gmra.mrb[0].mxu0 %v1610
      %v2112 = vpop.f32.mrb[0].mxu0
      %v2113 = vadd.f32 %v1927, %v2112
      %v2114 = vpop.f32.mrb[0].mxu0
      %2115 = vmatprep.mubr.f32.mxu0 %v1615
      %2116 = vmatmul.mubr.f32.gmra.mrb[0].mxu0 %v1614
      %v2117 = vpop.f32.mrb[0].mxu0
      %v2118 = vadd.f32 %v1927, %v2117
      %v2119 = vpop.f32.mrb[0].mxu0
      %2120 = vmatprep.mubr.f32.mxu0 %v1619
      %2121 = vmatmul.mubr.f32.gmra.mrb[0].mxu0 %v1618
      %v2122 = vpop.f32.mrb[0].mxu0
      %v2123 = vadd.f32 %v1927, %v2122
      %v2124 = vpop.f32.mrb[0].mxu0
      %2125 = vmatprep.mubr.f32.mxu0 %v1623
      %2126 = vmatmul.mubr.f32.gmra.mrb[0].mxu0 %v1622
      %v2127 = vpop.f32.mrb[0].mxu0
      %v2128 = vadd.f32 %v1927, %v2127
      %v2129 = vpop.f32.mrb[0].mxu0
      %2130 = vmatprep.mubr.f32.mxu0 %v1627
      %2131 = vmatmul.mubr.f32.gmra.mrb[0].mxu0 %v1626
      %v2132 = vpop.f32.mrb[0].mxu0
      %v2133 = vadd.f32 %v1927, %v2132
      %v2134 = vpop.f32.mrb[0].mxu0
      %2135 = vmatprep.mubr.f32.mxu0 %v1631
      %2136 = vmatmul.mubr.f32.gmra.mrb[0].mxu0 %v1630
      %v2137 = vpop.f32.mrb[0].mxu0
      %v2138 = vadd.f32 %v1927, %v2137
      %v2139 = vpop.f32.mrb[0].mxu0
      %2140 = vmatprep.mubr.f32.mxu0 %v1635
      %2141 = vmatmul.mubr.f32.gmra.mrb[0].mxu0 %v1634
      %v2142 = vpop.f32.mrb[0].mxu0
      %v2143 = vadd.f32 %v1927, %v2142
      %v2144 = vpop.f32.mrb[0].mxu0
      %2145 = vmatprep.mubr.f32.mxu0 %v1639
      %2146 = vmatmul.mubr.f32.gmra.mrb[0].mxu0 %v1638
      %v2147 = vpop.f32.mrb[0].mxu0
      %v2148 = vadd.f32 %v1927, %v2147
      %v2149 = vpop.f32.mrb[0].mxu0
      %2150 = vmatprep.mubr.f32.mxu0 %v1643
      %2151 = vmatmul.mubr.f32.gmra.mrb[0].mxu0 %v1642
      %v2152 = vpop.f32.mrb[0].mxu0
      %v2153 = vadd.f32 %v1927, %v2152
      %v2154 = vpop.f32.mrb[0].mxu0
      %2155 = vmatprep.mubr.f32.mxu0 %v1647
      %2156 = vmatmul.mubr.f32.gmra.mrb[0].mxu0 %v1646
      %v2157 = vpop.f32.mrb[0].mxu0
      %v2158 = vadd.f32 %v1927, %v2157
      %v2159 = vpop.f32.mrb[0].mxu0
      %2160 = vmatprep.mubr.f32.mxu0 %v1651
      %2161 = vmatmul.mubr.f32.gmra.mrb[0].mxu0 %v1650
      %v2162 = vpop.f32.mrb[0].mxu0
      %v2163 = vadd.f32 %v1927, %v2162
      %v2164 = vpop.f32.mrb[0].mxu0
      %2165 = vmatprep.mubr.f32.mxu0 %v1655
      %2166 = vmatmul.mubr.f32.gmra.mrb[0].mxu0 %v1654
      %v2167 = vpop.f32.mrb[0].mxu0
      %v2168 = vadd.f32 %v1927, %v2167
      %v2169 = vpop.f32.mrb[0].mxu0
      %2170 = vmatprep.mubr.f32.mxu0 %v1659
      %2171 = vmatmul.mubr.f32.gmra.mrb[0].mxu0 %v1658
      %v2172 = vpop.f32.mrb[0].mxu0
      %v2173 = vadd.f32 %v1927, %v2172
      %v2174 = vpop.f32.mrb[0].mxu0
      %2175 = vmatprep.mubr.f32.mxu0 %v1663
      %2176 = vmatmul.mubr.f32.gmra.mrb[0].mxu0 %v1662
      %v2177 = vpop.f32.mrb[0].mxu0
      %v2178 = vadd.f32 %v1927, %v2177
      %v2179 = vpop.f32.mrb[0].mxu0
      %2180 = vmatprep.mubr.f32.mxu0 %v1667
      %2181 = vmatmul.mubr.f32.gmra.mrb[0].mxu0 %v1666
      %v2182 = vpop.f32.mrb[0].mxu0
      %v2183 = vadd.f32 %v1927, %v2182
      %v2184 = vpop.f32.mrb[0].mxu0
      %2185 = vmatprep.mubr.f32.mxu0 %v1671
      %2186 = vmatmul.mubr.f32.gmra.mrb[0].mxu0 %v1670
      %v2187 = vpop.f32.mrb[0].mxu0
      %v2188 = vadd.f32 %v1927, %v2187
      %v2189 = vpop.f32.mrb[0].mxu0
      %2190 = vmatprep.mubr.f32.mxu0 %v1675
      %2191 = vmatmul.mubr.f32.gmra.mrb[0].mxu0 %v1674
      %v2192 = vpop.f32.mrb[0].mxu0
      %v2193 = vadd.f32 %v1927, %v2192
      %v2194 = vpop.f32.mrb[0].mxu0
      %2195 = vmatprep.mubr.f32.mxu0 %v1679
      %2196 = vmatmul.mubr.f32.gmra.mrb[0].mxu0 %v1678
      %v2197 = vpop.f32.mrb[0].mxu0
      %v2198 = vadd.f32 %v1927, %v2197
      %v2199 = vpop.f32.mrb[0].mxu0
      %2200 = vmatprep.mubr.f32.mxu0 %v1683
      %2201 = vmatmul.mubr.f32.gmra.mrb[0].mxu0 %v1682
      %v2202 = vpop.f32.mrb[0].mxu0
      %v2203 = vadd.f32 %v1927, %v2202
      %v2204 = vpop.f32.mrb[0].mxu0
      %2205 = vmatprep.mubr.f32.mxu0 %v1687
      %2206 = vmatmul.mubr.f32.gmra.mrb[0].mxu0 %v1686
      %v2207 = vpop.f32.mrb[0].mxu0
      %v2208 = vadd.f32 %v1927, %v2207
      %v2209 = vpop.f32.mrb[0].mxu0
      %2210 = vmatprep.mubr.f32.mxu0 %v1691
      %2211 = vmatmul.mubr.f32.gmra.mrb[0].mxu0 %v1690
      %v2212 = vpop.f32.mrb[0].mxu0
      %v2213 = vadd.f32 %v1927, %v2212
      %v2214 = vpop.f32.mrb[0].mxu0
      %2215 = vmatprep.mubr.f32.mxu0 %v1695
      %2216 = vmatmul.mubr.f32.gmra.mrb[0].mxu0 %v1694
      %v2217 = vpop.f32.mrb[0].mxu0
      %v2218 = vadd.f32 %v1927, %v2217
      %v2219 = vpop.f32.mrb[0].mxu0
      %2220 = vmatprep.mubr.f32.mxu0 %v1699
      %2221 = vmatmul.mubr.f32.gmra.mrb[0].mxu0 %v1698
      %v2222 = vpop.f32.mrb[0].mxu0
      %v2223 = vadd.f32 %v1927, %v2222
      %v2224 = vpop.f32.mrb[0].mxu0
      %2225 = vmatprep.mubr.f32.mxu0 %v1703
      %2226 = vmatmul.mubr.f32.gmra.mrb[0].mxu0 %v1702
      %v2227 = vpop.f32.mrb[0].mxu0
      %v2228 = vadd.f32 %v1927, %v2227
      %v2229 = vpop.f32.mrb[0].mxu0
      %2230 = vmatprep.mubr.f32.mxu0 %v1707
      %2231 = vmatmul.mubr.f32.gmra.mrb[0].mxu0 %v1706
      %v2232 = vpop.f32.mrb[0].mxu0
      %v2233 = vadd.f32 %v1927, %v2232
      %v2234 = vpop.f32.mrb[0].mxu0
      %2235 = vmatprep.mubr.f32.mxu0 %v1711
      %2236 = vmatmul.mubr.f32.gmra.mrb[0].mxu0 %v1710
      %v2237 = vpop.f32.mrb[0].mxu0
      %v2238 = vadd.f32 %v1927, %v2237
      %v2239 = vpop.f32.mrb[0].mxu0
      %2240 = vmatprep.mubr.f32.mxu0 %v1715
      %2241 = vmatmul.mubr.f32.gmra.mrb[0].mxu0 %v1714
      %v2242 = vpop.f32.mrb[0].mxu0
      %v2243 = vadd.f32 %v1927, %v2242
      %v2244 = vpop.f32.mrb[0].mxu0
      %2245 = vmatprep.mubr.f32.mxu0 %v1719
      %2246 = vmatmul.mubr.f32.gmra.mrb[0].mxu0 %v1718
      %v2247 = vpop.f32.mrb[0].mxu0
      %v2248 = vadd.f32 %v1927, %v2247
      %v2249 = vpop.f32.mrb[0].mxu0
      %2250 = vdwg.mxu0
      %2251 = vmatprep.subr.mxu0 0.0
      %2252 = vmatpush1.msra.mxu0 %v1882
      %2253 = vmatprep.subr.mxu0 0.0
      %2254 = vmatpush1.msra.mxu0 %v1883
      %2255 = vmatprep.subr.mxu0 0.0
      %2256 = vmatpush1.msra.mxu0 %v1884
      %2257 = vmatprep.subr.mxu0 0.0
      %2258 = vmatpush1.msra.mxu0 %v1885
      %2259 = vmatprep.subr.mxu0 0.0
      %2260 = vmatpush1.msra.mxu0 %v1886
      %2261 = vmatprep.subr.mxu0 0.0
      %2262 = vmatpush1.msra.mxu0 %v1887
      %2263 = vmatprep.subr.mxu0 0.0
      %2264 = vmatpush1.msra.mxu0 %v1888
      %2265 = vmatprep.subr.mxu0 0.0
      %2266 = vmatpush1.msra.mxu0 %v1889
      %2267 = vmatprep.subr.mxu0 0.0
      %2268 = vmatpush1.msra.mxu0 %v1890
      %2269 = vmatprep.subr.mxu0 0.0
      %2270 = vmatpush1.msra.mxu0 %v1891
      %2271 = vmatprep.subr.mxu0 0.0
      %2272 = vmatpush1.msra.mxu0 %v1892
      %2273 = vmatprep.subr.mxu0 0.0
      %2274 = vmatpush1.msra.mxu0 %v1893
      %2275 = vmatprep.subr.mxu0 0.0
      %2276 = vmatpush1.msra.mxu0 %v1894
      %2277 = vmatprep.subr.mxu0 0.0
      %2278 = vmatpush1.msra.mxu0 %v1895
      %2279 = vmatprep.subr.mxu0 0.0
      %2280 = vmatpush1.msra.mxu0 %v1896
      %2281 = vmatprep.subr.mxu0 0.0
      %2282 = vmatpush1.msra.mxu0 %v1897
      %2283 = vmatprep.subr.mxu0 0.0
      %2284 = vmatpush1.msra.mxu0 %v1898
      %2285 = vmatprep.subr.mxu0 0.0
      %2286 = vmatpush1.msra.mxu0 %v1899
      %2287 = vmatprep.subr.mxu0 0.0
      %2288 = vmatpush1.msra.mxu0 %v1900
      %2289 = vmatprep.subr.mxu0 0.0
      %2290 = vmatpush1.msra.mxu0 %v1901
      %2291 = vmatprep.subr.mxu0 0.0
      %2292 = vmatpush1.msra.mxu0 %v1902
      %2293 = vmatprep.subr.mxu0 0.0
      %2294 = vmatpush1.msra.mxu0 %v1903
      %2295 = vmatprep.subr.mxu0 0.0
      %2296 = vmatpush1.msra.mxu0 %v1904
      %2297 = vmatprep.subr.mxu0 0.0
      %2298 = vmatpush1.msra.mxu0 %v1905
      %2299 = vmatprep.subr.mxu0 0.0
      %2300 = vmatpush1.msra.mxu0 %v1906
      %2301 = vmatprep.subr.mxu0 0.0
      %2302 = vmatpush1.msra.mxu0 %v1907
      %2303 = vmatprep.subr.mxu0 0.0
      %2304 = vmatpush1.msra.mxu0 %v1908
      %2305 = vmatprep.subr.mxu0 0.0
      %2306 = vmatpush1.msra.mxu0 %v1909
      %2307 = vmatprep.subr.mxu0 0.0
      %2308 = vmatpush1.msra.mxu0 %v1910
      %2309 = vmatprep.subr.mxu0 0.0
      %2310 = vmatpush1.msra.mxu0 %v1911
      %2311 = vmatprep.subr.mxu0 0.0
      %2312 = vmatpush1.msra.mxu0 %v1912
      %2313 = vmatprep.subr.mxu0 0.0
      %2314 = vmatpush1.msra.mxu0 %v1913
      %2315 = vmatprep.mubr.f32.mxu0 %v1597
      %2316 = vmatmul.mubr.f32.gmra.mrb[0].mxu0 %v1596
      %v2317 = vpop.f32.mrb[0].mxu0
      %v2318 = vadd.f32 %v2093, %v2317
      %v2319 = vpop.f32.mrb[0].mxu0
      %2320 = vmatprep.mubr.f32.mxu0 %v1601
      %2321 = vmatmul.mubr.f32.gmra.mrb[0].mxu0 %v1600
      %v2322 = vpop.f32.mrb[0].mxu0
      %v2323 = vadd.f32 %v2098, %v2322
      %v2324 = vpop.f32.mrb[0].mxu0
      %2325 = vmatprep.mubr.f32.mxu0 %v1605
      %2326 = vmatmul.mubr.f32.gmra.mrb[0].mxu0 %v1604
      %v2327 = vpop.f32.mrb[0].mxu0
      %v2328 = vadd.f32 %v2103, %v2327
      %v2329 = vpop.f32.mrb[0].mxu0
      %2330 = vmatprep.mubr.f32.mxu0 %v1609
      %2331 = vmatmul.mubr.f32.gmra.mrb[0].mxu0 %v1608
      %v2332 = vpop.f32.mrb[0].mxu0
      %v2333 = vadd.f32 %v2108, %v2332
      %v2334 = vpop.f32.mrb[0].mxu0
      %2335 = vmatprep.mubr.f32.mxu0 %v1613
      %2336 = vmatmul.mubr.f32.gmra.mrb[0].mxu0 %v1612
      %v2337 = vpop.f32.mrb[0].mxu0
      %v2338 = vadd.f32 %v2113, %v2337
      %v2339 = vpop.f32.mrb[0].mxu0
      %2340 = vmatprep.mubr.f32.mxu0 %v1617
      %2341 = vmatmul.mubr.f32.gmra.mrb[0].mxu0 %v1616
      %v2342 = vpop.f32.mrb[0].mxu0
      %v2343 = vadd.f32 %v2118, %v2342
      %v2344 = vpop.f32.mrb[0].mxu0
      %2345 = vmatprep.mubr.f32.mxu0 %v1621
      %2346 = vmatmul.mubr.f32.gmra.mrb[0].mxu0 %v1620
      %v2347 = vpop.f32.mrb[0].mxu0
      %v2348 = vadd.f32 %v2123, %v2347
      %v2349 = vpop.f32.mrb[0].mxu0
      %2350 = vmatprep.mubr.f32.mxu0 %v1625
      %2351 = vmatmul.mubr.f32.gmra.mrb[0].mxu0 %v1624
      %v2352 = vpop.f32.mrb[0].mxu0
      %v2353 = vadd.f32 %v2128, %v2352
      %v2354 = vpop.f32.mrb[0].mxu0
      %2355 = vmatprep.mubr.f32.mxu0 %v1629
      %2356 = vmatmul.mubr.f32.gmra.mrb[0].mxu0 %v1628
      %v2357 = vpop.f32.mrb[0].mxu0
      %v2358 = vadd.f32 %v2133, %v2357
      %v2359 = vpop.f32.mrb[0].mxu0
      %2360 = vmatprep.mubr.f32.mxu0 %v1633
      %2361 = vmatmul.mubr.f32.gmra.mrb[0].mxu0 %v1632
      %v2362 = vpop.f32.mrb[0].mxu0
      %v2363 = vadd.f32 %v2138, %v2362
      %v2364 = vpop.f32.mrb[0].mxu0
      %2365 = vmatprep.mubr.f32.mxu0 %v1637
      %2366 = vmatmul.mubr.f32.gmra.mrb[0].mxu0 %v1636
      %v2367 = vpop.f32.mrb[0].mxu0
      %v2368 = vadd.f32 %v2143, %v2367
      %v2369 = vpop.f32.mrb[0].mxu0
      %2370 = vmatprep.mubr.f32.mxu0 %v1641
      %2371 = vmatmul.mubr.f32.gmra.mrb[0].mxu0 %v1640
      %v2372 = vpop.f32.mrb[0].mxu0
      %v2373 = vadd.f32 %v2148, %v2372
      %v2374 = vpop.f32.mrb[0].mxu0
      %2375 = vmatprep.mubr.f32.mxu0 %v1645
      %2376 = vmatmul.mubr.f32.gmra.mrb[0].mxu0 %v1644
      %v2377 = vpop.f32.mrb[0].mxu0
      %v2378 = vadd.f32 %v2153, %v2377
      %v2379 = vpop.f32.mrb[0].mxu0
      %2380 = vmatprep.mubr.f32.mxu0 %v1649
      %2381 = vmatmul.mubr.f32.gmra.mrb[0].mxu0 %v1648
      %v2382 = vpop.f32.mrb[0].mxu0
      %v2383 = vadd.f32 %v2158, %v2382
      %v2384 = vpop.f32.mrb[0].mxu0
      %2385 = vmatprep.mubr.f32.mxu0 %v1653
      %2386 = vmatmul.mubr.f32.gmra.mrb[0].mxu0 %v1652
      %v2387 = vpop.f32.mrb[0].mxu0
      %v2388 = vadd.f32 %v2163, %v2387
      %v2389 = vpop.f32.mrb[0].mxu0
      %2390 = vmatprep.mubr.f32.mxu0 %v1657
      %2391 = vmatmul.mubr.f32.gmra.mrb[0].mxu0 %v1656
      %v2392 = vpop.f32.mrb[0].mxu0
      %v2393 = vadd.f32 %v2168, %v2392
      %v2394 = vpop.f32.mrb[0].mxu0
      %2395 = vmatprep.mubr.f32.mxu0 %v1661
      %2396 = vmatmul.mubr.f32.gmra.mrb[0].mxu0 %v1660
      %v2397 = vpop.f32.mrb[0].mxu0
      %v2398 = vadd.f32 %v2173, %v2397
      %v2399 = vpop.f32.mrb[0].mxu0
      %2400 = vmatprep.mubr.f32.mxu0 %v1665
      %2401 = vmatmul.mubr.f32.gmra.mrb[0].mxu0 %v1664
      %v2402 = vpop.f32.mrb[0].mxu0
      %v2403 = vadd.f32 %v2178, %v2402
      %v2404 = vpop.f32.mrb[0].mxu0
      %2405 = vmatprep.mubr.f32.mxu0 %v1669
      %2406 = vmatmul.mubr.f32.gmra.mrb[0].mxu0 %v1668
      %v2407 = vpop.f32.mrb[0].mxu0
      %v2408 = vadd.f32 %v2183, %v2407
      %v2409 = vpop.f32.mrb[0].mxu0
      %2410 = vmatprep.mubr.f32.mxu0 %v1673
      %2411 = vmatmul.mubr.f32.gmra.mrb[0].mxu0 %v1672
      %v2412 = vpop.f32.mrb[0].mxu0
      %v2413 = vadd.f32 %v2188, %v2412
      %v2414 = vpop.f32.mrb[0].mxu0
      %2415 = vmatprep.mubr.f32.mxu0 %v1677
      %2416 = vmatmul.mubr.f32.gmra.mrb[0].mxu0 %v1676
      %v2417 = vpop.f32.mrb[0].mxu0
      %v2418 = vadd.f32 %v2193, %v2417
      %v2419 = vpop.f32.mrb[0].mxu0
      %2420 = vmatprep.mubr.f32.mxu0 %v1681
      %2421 = vmatmul.mubr.f32.gmra.mrb[0].mxu0 %v1680
      %v2422 = vpop.f32.mrb[0].mxu0
      %v2423 = vadd.f32 %v2198, %v2422
      %v2424 = vpop.f32.mrb[0].mxu0
      %2425 = vmatprep.mubr.f32.mxu0 %v1685
      %2426 = vmatmul.mubr.f32.gmra.mrb[0].mxu0 %v1684
      %v2427 = vpop.f32.mrb[0].mxu0
      %v2428 = vadd.f32 %v2203, %v2427
      %v2429 = vpop.f32.mrb[0].mxu0
      %2430 = vmatprep.mubr.f32.mxu0 %v1689
      %2431 = vmatmul.mubr.f32.gmra.mrb[0].mxu0 %v1688
      %v2432 = vpop.f32.mrb[0].mxu0
      %v2433 = vadd.f32 %v2208, %v2432
      %v2434 = vpop.f32.mrb[0].mxu0
      %2435 = vmatprep.mubr.f32.mxu0 %v1693
      %2436 = vmatmul.mubr.f32.gmra.mrb[0].mxu0 %v1692
      %v2437 = vpop.f32.mrb[0].mxu0
      %v2438 = vadd.f32 %v2213, %v2437
      %v2439 = vpop.f32.mrb[0].mxu0
      %2440 = vmatprep.mubr.f32.mxu0 %v1697
      %2441 = vmatmul.mubr.f32.gmra.mrb[0].mxu0 %v1696
      %v2442 = vpop.f32.mrb[0].mxu0
      %v2443 = vadd.f32 %v2218, %v2442
      %v2444 = vpop.f32.mrb[0].mxu0
      %2445 = vmatprep.mubr.f32.mxu0 %v1701
      %2446 = vmatmul.mubr.f32.gmra.mrb[0].mxu0 %v1700
      %v2447 = vpop.f32.mrb[0].mxu0
      %v2448 = vadd.f32 %v2223, %v2447
      %v2449 = vpop.f32.mrb[0].mxu0
      %2450 = vmatprep.mubr.f32.mxu0 %v1705
      %2451 = vmatmul.mubr.f32.gmra.mrb[0].mxu0 %v1704
      %v2452 = vpop.f32.mrb[0].mxu0
      %v2453 = vadd.f32 %v2228, %v2452
      %v2454 = vpop.f32.mrb[0].mxu0
      %2455 = vmatprep.mubr.f32.mxu0 %v1709
      %2456 = vmatmul.mubr.f32.gmra.mrb[0].mxu0 %v1708
      %v2457 = vpop.f32.mrb[0].mxu0
      %v2458 = vadd.f32 %v2233, %v2457
      %v2459 = vpop.f32.mrb[0].mxu0
      %2460 = vmatprep.mubr.f32.mxu0 %v1713
      %2461 = vmatmul.mubr.f32.gmra.mrb[0].mxu0 %v1712
      %v2462 = vpop.f32.mrb[0].mxu0
      %v2463 = vadd.f32 %v2238, %v2462
      %v2464 = vpop.f32.mrb[0].mxu0
      %2465 = vmatprep.mubr.f32.mxu0 %v1717
      %2466 = vmatmul.mubr.f32.gmra.mrb[0].mxu0 %v1716
      %v2467 = vpop.f32.mrb[0].mxu0
      %v2468 = vadd.f32 %v2243, %v2467
      %v2469 = vpop.f32.mrb[0].mxu0
      %2470 = vmatprep.mubr.f32.mxu0 %v1721
      %2471 = vmatmul.mubr.f32.gmra.mrb[0].mxu0 %v1720
      %v2472 = vpop.f32.mrb[0].mxu0
      %v2473 = vadd.f32 %v2248, %v2472
      %v2474 = vpop.f32.mrb[0].mxu0
      %2475 = vdwg.mxu0
      %2476 = vmatprep.subr.mxu0 0.0
      %2477 = vmatpush1.msra.mxu0 %v1914
      %2478 = vmatprep.subr.mxu0 0.0
      %2479 = vmatpush1.msra.mxu0 %v1915
      %2480 = vmatprep.subr.mxu0 0.0
      %2481 = vmatpush1.msra.mxu0 %v1916
      %2482 = vmatprep.subr.mxu0 0.0
      %2483 = vmatpush1.msra.mxu0 %v1917
      %2484 = vmatprep.subr.mxu0 0.0
      %2485 = vmatpush1.msra.mxu0 %v1918
      %2486 = vmatprep.subr.mxu0 0.0
      %2487 = vmatpush1.msra.mxu0 %v1919
      %2488 = vmatprep.subr.mxu0 0.0
      %2489 = vmatpush1.msra.mxu0 %v1920
      %2490 = vmatprep.subr.mxu0 0.0
      %2491 = vmatpush1.msra.mxu0 %v1921
      %2492 = vmatprep.subr.mxu0 0.0
      %2493 = vmatpush1.msra.mxu0 0.0
      %2494 = vmatprep.subr.mxu0 0.0
      %2495 = vmatpush1.msra.mxu0 0.0
      %2496 = vmatprep.subr.mxu0 0.0
      %2497 = vmatpush1.msra.mxu0 0.0
      %2498 = vmatprep.subr.mxu0 0.0
      %2499 = vmatpush1.msra.mxu0 0.0
      %2500 = vmatprep.subr.mxu0 0.0
      %2501 = vmatpush1.msra.mxu0 0.0
      %2502 = vmatprep.subr.mxu0 0.0
      %2503 = vmatpush1.msra.mxu0 0.0
      %2504 = vmatprep.subr.mxu0 0.0
      %2505 = vmatpush1.msra.mxu0 0.0
      %2506 = vmatprep.subr.mxu0 0.0
      %2507 = vmatpush1.msra.mxu0 0.0
      %2508 = vmatprep.subr.mxu0 0.0
      %2509 = vmatpush1.msra.mxu0 0.0
      %2510 = vmatprep.subr.mxu0 0.0
      %2511 = vmatpush1.msra.mxu0 0.0
      %2512 = vmatprep.subr.mxu0 0.0
      %2513 = vmatpush1.msra.mxu0 0.0
      %2514 = vmatprep.subr.mxu0 0.0
      %2515 = vmatpush1.msra.mxu0 0.0
      %2516 = vmatprep.subr.mxu0 0.0
      %2517 = vmatpush1.msra.mxu0 0.0
      %2518 = vmatprep.subr.mxu0 0.0
      %2519 = vmatpush1.msra.mxu0 0.0
      %2520 = vmatprep.subr.mxu0 0.0
      %2521 = vmatpush1.msra.mxu0 0.0
      %2522 = vmatprep.subr.mxu0 0.0
      %2523 = vmatpush1.msra.mxu0 0.0
      %2524 = vmatprep.subr.mxu0 0.0
      %2525 = vmatpush1.msra.mxu0 0.0
      %2526 = vmatprep.subr.mxu0 0.0
      %2527 = vmatpush1.msra.mxu0 0.0
      %2528 = vmatprep.subr.mxu0 0.0
      %2529 = vmatpush1.msra.mxu0 0.0
      %2530 = vmatprep.subr.mxu0 0.0
      %2531 = vmatpush1.msra.mxu0 0.0
      %2532 = vmatprep.subr.mxu0 0.0
      %2533 = vmatpush1.msra.mxu0 0.0
      %2534 = vmatprep.subr.mxu0 0.0
      %2535 = vmatpush1.msra.mxu0 0.0
      %2536 = vmatprep.subr.mxu0 0.0
      %2537 = vmatpush1.msra.mxu0 0.0
      %2538 = vmatprep.subr.mxu0 0.0
      %2539 = vmatpush1.msra.mxu0 0.0
      %2540 = vmatprep.mubr.f32.mxu0 0.0
      %2541 = vmatmul.mubr.f32.gmra.mrb[0].mxu0 %v1931
      %v2542 = vpop.f32.mrb[0].mxu0
      %v2543 = vadd.f32 %v2318, %v2542
      %v2544 = vpop.f32.mrb[0].mxu0
      %2545 = vmatprep.mubr.f32.mxu0 0.0
      %2546 = vmatmul.mubr.f32.gmra.mrb[0].mxu0 %v1934
      %v2547 = vpop.f32.mrb[0].mxu0
      %v2548 = vadd.f32 %v2323, %v2547
      %v2549 = vpop.f32.mrb[0].mxu0
      %2550 = vmatprep.mubr.f32.mxu0 0.0
      %2551 = vmatmul.mubr.f32.gmra.mrb[0].mxu0 %v1937
      %v2552 = vpop.f32.mrb[0].mxu0
      %v2553 = vadd.f32 %v2328, %v2552
      %v2554 = vpop.f32.mrb[0].mxu0
      %2555 = vmatprep.mubr.f32.mxu0 0.0
      %2556 = vmatmul.mubr.f32.gmra.mrb[0].mxu0 %v1940
      %v2557 = vpop.f32.mrb[0].mxu0
      %v2558 = vadd.f32 %v2333, %v2557
      %v2559 = vpop.f32.mrb[0].mxu0
      %2560 = vmatprep.mubr.f32.mxu0 0.0
      %2561 = vmatmul.mubr.f32.gmra.mrb[0].mxu0 %v1943
      %v2562 = vpop.f32.mrb[0].mxu0
      %v2563 = vadd.f32 %v2338, %v2562
      %v2564 = vpop.f32.mrb[0].mxu0
      %2565 = vmatprep.mubr.f32.mxu0 0.0
      %2566 = vmatmul.mubr.f32.gmra.mrb[0].mxu0 %v1946
      %v2567 = vpop.f32.mrb[0].mxu0
      %v2568 = vadd.f32 %v2343, %v2567
      %v2569 = vpop.f32.mrb[0].mxu0
      %2570 = vmatprep.mubr.f32.mxu0 0.0
      %2571 = vmatmul.mubr.f32.gmra.mrb[0].mxu0 %v1949
      %v2572 = vpop.f32.mrb[0].mxu0
      %v2573 = vadd.f32 %v2348, %v2572
      %v2574 = vpop.f32.mrb[0].mxu0
      %2575 = vmatprep.mubr.f32.mxu0 0.0
      %2576 = vmatmul.mubr.f32.gmra.mrb[0].mxu0 %v1952
      %v2577 = vpop.f32.mrb[0].mxu0
      %v2578 = vadd.f32 %v2353, %v2577
      %v2579 = vpop.f32.mrb[0].mxu0
      %2580 = vmatprep.mubr.f32.mxu0 0.0
      %2581 = vmatmul.mubr.f32.gmra.mrb[0].mxu0 %v1955
      %v2582 = vpop.f32.mrb[0].mxu0
      %v2583 = vadd.f32 %v2358, %v2582
      %v2584 = vpop.f32.mrb[0].mxu0
      %2585 = vmatprep.mubr.f32.mxu0 0.0
      %2586 = vmatmul.mubr.f32.gmra.mrb[0].mxu0 %v1958
      %v2587 = vpop.f32.mrb[0].mxu0
      %v2588 = vadd.f32 %v2363, %v2587
      %v2589 = vpop.f32.mrb[0].mxu0
      %2590 = vmatprep.mubr.f32.mxu0 0.0
      %2591 = vmatmul.mubr.f32.gmra.mrb[0].mxu0 %v1961
      %v2592 = vpop.f32.mrb[0].mxu0
      %v2593 = vadd.f32 %v2368, %v2592
      %v2594 = vpop.f32.mrb[0].mxu0
      %2595 = vmatprep.mubr.f32.mxu0 0.0
      %2596 = vmatmul.mubr.f32.gmra.mrb[0].mxu0 %v1964
      %v2597 = vpop.f32.mrb[0].mxu0
      %v2598 = vadd.f32 %v2373, %v2597
      %v2599 = vpop.f32.mrb[0].mxu0
      %2600 = vmatprep.mubr.f32.mxu0 0.0
      %2601 = vmatmul.mubr.f32.gmra.mrb[0].mxu0 %v1967
      %v2602 = vpop.f32.mrb[0].mxu0
      %v2603 = vadd.f32 %v2378, %v2602
      %v2604 = vpop.f32.mrb[0].mxu0
      %2605 = vmatprep.mubr.f32.mxu0 0.0
      %2606 = vmatmul.mubr.f32.gmra.mrb[0].mxu0 %v1970
      %v2607 = vpop.f32.mrb[0].mxu0
      %v2608 = vadd.f32 %v2383, %v2607
      %v2609 = vpop.f32.mrb[0].mxu0
      %2610 = vmatprep.mubr.f32.mxu0 0.0
      %2611 = vmatmul.mubr.f32.gmra.mrb[0].mxu0 %v1973
      %v2612 = vpop.f32.mrb[0].mxu0
      %v2613 = vadd.f32 %v2388, %v2612
      %v2614 = vpop.f32.mrb[0].mxu0
      %2615 = vmatprep.mubr.f32.mxu0 0.0
      %2616 = vmatmul.mubr.f32.gmra.mrb[0].mxu0 %v1976
      %v2617 = vpop.f32.mrb[0].mxu0
      %v2618 = vadd.f32 %v2393, %v2617
      %v2619 = vpop.f32.mrb[0].mxu0
      %2620 = vmatprep.mubr.f32.mxu0 0.0
      %2621 = vmatmul.mubr.f32.gmra.mrb[0].mxu0 %v1979
      %v2622 = vpop.f32.mrb[0].mxu0
      %v2623 = vadd.f32 %v2398, %v2622
      %v2624 = vpop.f32.mrb[0].mxu0
      %2625 = vmatprep.mubr.f32.mxu0 0.0
      %2626 = vmatmul.mubr.f32.gmra.mrb[0].mxu0 %v1982
      %v2627 = vpop.f32.mrb[0].mxu0
      %v2628 = vadd.f32 %v2403, %v2627
      %v2629 = vpop.f32.mrb[0].mxu0
      %2630 = vmatprep.mubr.f32.mxu0 0.0
      %2631 = vmatmul.mubr.f32.gmra.mrb[0].mxu0 %v1985
      %v2632 = vpop.f32.mrb[0].mxu0
      %v2633 = vadd.f32 %v2408, %v2632
      %v2634 = vpop.f32.mrb[0].mxu0
      %2635 = vmatprep.mubr.f32.mxu0 0.0
      %2636 = vmatmul.mubr.f32.gmra.mrb[0].mxu0 %v1988
      %v2637 = vpop.f32.mrb[0].mxu0
      %v2638 = vadd.f32 %v2413, %v2637
      %v2639 = vpop.f32.mrb[0].mxu0
      %2640 = vmatprep.mubr.f32.mxu0 0.0
      %2641 = vmatmul.mubr.f32.gmra.mrb[0].mxu0 %v1991
      %v2642 = vpop.f32.mrb[0].mxu0
      %v2643 = vadd.f32 %v2418, %v2642
      %v2644 = vpop.f32.mrb[0].mxu0
      %2645 = vmatprep.mubr.f32.mxu0 0.0
      %2646 = vmatmul.mubr.f32.gmra.mrb[0].mxu0 %v1994
      %v2647 = vpop.f32.mrb[0].mxu0
      %v2648 = vadd.f32 %v2423, %v2647
      %v2649 = vpop.f32.mrb[0].mxu0
      %2650 = vmatprep.mubr.f32.mxu0 0.0
      %2651 = vmatmul.mubr.f32.gmra.mrb[0].mxu0 %v1997
      %v2652 = vpop.f32.mrb[0].mxu0
      %v2653 = vadd.f32 %v2428, %v2652
      %v2654 = vpop.f32.mrb[0].mxu0
      %2655 = vmatprep.mubr.f32.mxu0 0.0
      %2656 = vmatmul.mubr.f32.gmra.mrb[0].mxu0 %v2000
      %v2657 = vpop.f32.mrb[0].mxu0
      %v2658 = vadd.f32 %v2433, %v2657
      %v2659 = vpop.f32.mrb[0].mxu0
      %2660 = vmatprep.mubr.f32.mxu0 0.0
      %2661 = vmatmul.mubr.f32.gmra.mrb[0].mxu0 %v2003
      %v2662 = vpop.f32.mrb[0].mxu0
      %v2663 = vadd.f32 %v2438, %v2662
      %v2664 = vpop.f32.mrb[0].mxu0
      %2665 = vmatprep.mubr.f32.mxu0 0.0
      %2666 = vmatmul.mubr.f32.gmra.mrb[0].mxu0 %v2006
      %v2667 = vpop.f32.mrb[0].mxu0
      %v2668 = vadd.f32 %v2443, %v2667
      %v2669 = vpop.f32.mrb[0].mxu0
      %2670 = vmatprep.mubr.f32.mxu0 0.0
      %2671 = vmatmul.mubr.f32.gmra.mrb[0].mxu0 %v2009
      %v2672 = vpop.f32.mrb[0].mxu0
      %v2673 = vadd.f32 %v2448, %v2672
      %v2674 = vpop.f32.mrb[0].mxu0
      %2675 = vmatprep.mubr.f32.mxu0 0.0
      %2676 = vmatmul.mubr.f32.gmra.mrb[0].mxu0 %v2012
      %v2677 = vpop.f32.mrb[0].mxu0
      %v2678 = vadd.f32 %v2453, %v2677
      %v2679 = vpop.f32.mrb[0].mxu0
      %2680 = vmatprep.mubr.f32.mxu0 0.0
      %2681 = vmatmul.mubr.f32.gmra.mrb[0].mxu0 %v2015
      %v2682 = vpop.f32.mrb[0].mxu0
      %v2683 = vadd.f32 %v2458, %v2682
      %v2684 = vpop.f32.mrb[0].mxu0
      %2685 = vmatprep.mubr.f32.mxu0 0.0
      %2686 = vmatmul.mubr.f32.gmra.mrb[0].mxu0 %v2018
      %v2687 = vpop.f32.mrb[0].mxu0
      %v2688 = vadd.f32 %v2463, %v2687
      %v2689 = vpop.f32.mrb[0].mxu0
      %2690 = vmatprep.mubr.f32.mxu0 0.0
      %2691 = vmatmul.mubr.f32.gmra.mrb[0].mxu0 %v2021
      %v2692 = vpop.f32.mrb[0].mxu0
      %v2693 = vadd.f32 %v2468, %v2692
      %v2694 = vpop.f32.mrb[0].mxu0
      %2695 = vmatprep.mubr.f32.mxu0 0.0
      %2696 = vmatmul.mubr.f32.gmra.mrb[0].mxu0 %v2024
      %v2697 = vpop.f32.mrb[0].mxu0
      %v2698 = vadd.f32 %v2473, %v2697
      %v2699 = vpop.f32.mrb[0].mxu0
      %2700 = vdwg.mxu0
      %v2701 = vmax.f32 %v2543, 0.0
      %v2702 = vmax.f32 %v2548, 0.0
      %v2703 = vmax.f32 %v2553, 0.0
      %v2704 = vmax.f32 %v2558, 0.0
      %v2705 = vmax.f32 %v2563, 0.0
      %v2706 = vmax.f32 %v2568, 0.0
      %v2707 = vmax.f32 %v2573, 0.0
      %v2708 = vmax.f32 %v2578, 0.0
      %v2709 = vmax.f32 %v2583, 0.0
      %v2710 = vmax.f32 %v2588, 0.0
      %v2711 = vmax.f32 %v2593, 0.0
      %v2712 = vmax.f32 %v2598, 0.0
      %v2713 = vmax.f32 %v2603, 0.0
      %v2714 = vmax.f32 %v2608, 0.0
      %v2715 = vmax.f32 %v2613, 0.0
      %v2716 = vmax.f32 %v2618, 0.0
      %v2717 = vmax.f32 %v2623, 0.0
      %v2718 = vmax.f32 %v2628, 0.0
      %v2719 = vmax.f32 %v2633, 0.0
      %v2720 = vmax.f32 %v2638, 0.0
      %v2721 = vmax.f32 %v2643, 0.0
      %v2722 = vmax.f32 %v2648, 0.0
      %v2723 = vmax.f32 %v2653, 0.0
      %v2724 = vmax.f32 %v2658, 0.0
      %v2725 = vmax.f32 %v2663, 0.0
      %v2726 = vmax.f32 %v2668, 0.0
      %v2727 = vmax.f32 %v2673, 0.0
      %v2728 = vmax.f32 %v2678, 0.0
      %v2729 = vmax.f32 %v2683, 0.0
      %v2730 = vmax.f32 %v2688, 0.0
      %v2731 = vmax.f32 %v2693, 0.0
      %v2732 = vmax.f32 %v2698, 0.0
      %vm2733 = vcmask 130048
      %2734 = vst.msk [vmem:[%s275] sm:$0xff] %vm2733, %v2701
      %2735 = vst.msk [vmem:[%s275 + $0x8] sm:$0xff] %vm2733, %v2702
      %2736 = vst.msk [vmem:[%s275 + $0x10] sm:$0xff] %vm2733, %v2703
      %2737 = vst.msk [vmem:[%s275 + $0x18] sm:$0xff] %vm2733, %v2704
      %2738 = vst.msk [vmem:[%s275 + $0x20] sm:$0xff] %vm2733, %v2705
      %2739 = vst.msk [vmem:[%s275 + $0x28] sm:$0xff] %vm2733, %v2706
      %2740 = vst.msk [vmem:[%s275 + $0x30] sm:$0xff] %vm2733, %v2707
      %2741 = vst.msk [vmem:[%s275 + $0x38] sm:$0xff] %vm2733, %v2708
      %2742 = vst.msk [vmem:[%s275 + $0x40] sm:$0xff] %vm2733, %v2709
      %2743 = vst.msk [vmem:[%s275 + $0x48] sm:$0xff] %vm2733, %v2710
      %2744 = vst.msk [vmem:[%s275 + $0x50] sm:$0xff] %vm2733, %v2711
      %2745 = vst.msk [vmem:[%s275 + $0x58] sm:$0xff] %vm2733, %v2712
      %2746 = vst.msk [vmem:[%s275 + $0x60] sm:$0xff] %vm2733, %v2713
      %2747 = vst.msk [vmem:[%s275 + $0x68] sm:$0xff] %vm2733, %v2714
      %2748 = vst.msk [vmem:[%s275 + $0x70] sm:$0xff] %vm2733, %v2715
      %2749 = vst.msk [vmem:[%s275 + $0x78] sm:$0xff] %vm2733, %v2716
      %2750 = vst.msk [vmem:[%s275 + $0x80] sm:$0xff] %vm2733, %v2717
      %2751 = vst.msk [vmem:[%s275 + $0x88] sm:$0xff] %vm2733, %v2718
      %2752 = vst.msk [vmem:[%s275 + $0x90] sm:$0xff] %vm2733, %v2719
      %2753 = vst.msk [vmem:[%s275 + $0x98] sm:$0xff] %vm2733, %v2720
      %2754 = vst.msk [vmem:[%s275 + $0xa0] sm:$0xff] %vm2733, %v2721
      %2755 = vst.msk [vmem:[%s275 + $0xa8] sm:$0xff] %vm2733, %v2722
      %2756 = vst.msk [vmem:[%s275 + $0xb0] sm:$0xff] %vm2733, %v2723
      %2757 = vst.msk [vmem:[%s275 + $0xb8] sm:$0xff] %vm2733, %v2724
      %2758 = vst.msk [vmem:[%s275 + $0xc0] sm:$0xff] %vm2733, %v2725
      %2759 = vst.msk [vmem:[%s275 + $0xc8] sm:$0xff] %vm2733, %v2726
      %2760 = vst.msk [vmem:[%s275 + $0xd0] sm:$0xff] %vm2733, %v2727
      %2761 = vst.msk [vmem:[%s275 + $0xd8] sm:$0xff] %vm2733, %v2728
      %2762 = vst.msk [vmem:[%s275 + $0xe0] sm:$0xff] %vm2733, %v2729
      %2763 = vst.msk [vmem:[%s275 + $0xe8] sm:$0xff] %vm2733, %v2730
      %2764 = vst.msk [vmem:[%s275 + $0xf0] sm:$0xff] %vm2733, %v2731
      %2765 = vst.msk [vmem:[%s275 + $0xf8] sm:$0xff] %vm2733, %v2732
      %s2766 = smul.u32 32, %s17
      %p2767 = scmp.lt.s32.totalorder %s2766, 63
      %s2768 = scalar_select %p2767, %s2766, 63
      %s2769 = smul.addr %s2768, 8
      %s2770 = scalar_lea.vmem %s6, %s2769
      // Predicated region
      $region45: #{tpu_custom_call.1} parent=43 // pred_check
        %p2771 = pneg %p171
      $region46: #{tpu_custom_call.1} parent=43 // pred_check_branch
        %2773 = sbr.rel (%p2771) target = $region48
      $region47: #{tpu_custom_call.1} parent=43 // pred_region
        %s2774 = smul.u32 32, %s17
      $region48: #{tpu_custom_call.1} parent=43 // pred_fallthru
        _
    $region44: #{tpu_custom_call.1} parent=5 // pred_fallthru
      _
    %p2775 = scmp.le.s32.totalorder 2, %s12
    // Predicated region
    $region49: #{tpu_custom_call.1} parent=5 // pred_check
      %p2776 = pneg %p2775
    $region50: #{tpu_custom_call.1} parent=5 // pred_check_branch
      %2778 = sbr.rel (%p2776) target = $region52
    $region51: #{tpu_custom_call.1} parent=5 // pred_region
      %s2779 = ssub.s32 %s12, 2
      // Predicated region
      $region53: #{tpu_custom_call.1} parent=51 // pred_check
        %p2780 = pneg %p177
      $region54: #{tpu_custom_call.1} parent=51 // pred_check_branch
        %2782 = sbr.rel (%p2780) target = $region56
      $region55: #{tpu_custom_call.1} parent=51 // pred_region
        %s2783 = smul.u32 32, %s18
        %p2784 = scmp.lt.s32.totalorder %s2783, 63
        %s2785 = scalar_select %p2784, %s2783, 63
        %s2786 = smul.addr %s2785, 8
        %s2787 = scalar_lea.vmem %s6, %s2786
      $region56: #{tpu_custom_call.1} parent=51 // pred_fallthru
        _
    $region52: #{tpu_custom_call.1} parent=5 // pred_fallthru
      _
  $region6: #{tpu_custom_call.1} parent=0 // loop_footer
    %s16 = sadd.s32 1, %s12
  $region7: #{tpu_custom_call.1} parent=0 // loop_footer_branch
    %11 = sbr.rel target = $region3
  $region8: #{tpu_custom_call.1} parent=0 // loop_exit
    _

</llo_original>
